<compile_context>
chip_gen: v6e
topology: v6e:2x2x1
jax: 0.10.0
libtpu: 0.0.40
codegen_flags: <defaults>
</compile_context>

<pallas_src>
import jax
import jax.numpy as jnp
from jax.experimental import pallas as pl
from jax.experimental.pallas import tpu as pltpu


_LANE = 128      # pad tiny fc3 output to a full lane group (unmasked vst)
_SUBLANE = 8     # f32 sublane granularity for the batch (M) dimension


def _round_up(x, m):
    return ((x + m - 1) // m) * m


def _mlp_kernel(x_ref, w1_ref, b1_ref, w2_ref, b2_ref, w3_ref, b3_ref, o_ref):
    # In-kernel bf16 cast of the streamed x tile (no wrapper-side HBM pass).
    x = x_ref[...].astype(jnp.bfloat16)

    # fc1: bf16 x bf16 -> f32 accumulate on the MXU; bias + ReLU + downcast fused.
    h1 = jnp.dot(x, w1_ref[...], preferred_element_type=jnp.float32)
    h1 = jnp.maximum(h1 + b1_ref[...], 0.0).astype(jnp.bfloat16)

    # dropout(p=0.2): identity at inference time.

    # fc2 + ReLU (same fused epilogue).
    h2 = jnp.dot(h1, w2_ref[...], preferred_element_type=jnp.float32)
    h2 = jnp.maximum(h2 + b2_ref[...], 0.0).astype(jnp.bfloat16)

    # fc3 (no activation); output lanes pre-padded to 128 for lane-dense stores.
    out = jnp.dot(h2, w3_ref[...], preferred_element_type=jnp.float32)
    o_ref[...] = (out + b3_ref[...]).astype(o_ref.dtype)


def prepare_params(params, lane=_LANE):
    """One-time, load-time conversion: bf16 weights ([in, out]), f32 biases,
    fc3 weight/bias padded out to a full lane group.  Do NOT call per inference."""
    w1 = jnp.asarray(params["w1"]).astype(jnp.bfloat16)
    w2 = jnp.asarray(params["w2"]).astype(jnp.bfloat16)
    w3 = jnp.asarray(params["w3"]).astype(jnp.bfloat16)
    b1 = jnp.asarray(params["b1"]).astype(jnp.float32).reshape(1, -1)
    b2 = jnp.asarray(params["b2"]).astype(jnp.float32).reshape(1, -1)
    b3 = jnp.asarray(params["b3"]).astype(jnp.float32).reshape(1, -1)

    out_dim = w3.shape[1]
    out_pad = _round_up(out_dim, lane)
    if out_pad != out_dim:
        w3 = jnp.pad(w3, ((0, 0), (0, out_pad - out_dim)))
        b3 = jnp.pad(b3, ((0, 0), (0, out_pad - out_dim)))

    return {"w1": w1, "b1": b1, "w2": w2, "b2": b2, "w3": w3, "b3": b3,
            "out_dim": out_dim}


def _choose_tile_b(B, tile_b):
    # Shrink the tile for tiny batches (keep it an f32-sublane multiple).
    tile_b = max(_SUBLANE, min(tile_b, _round_up(max(B, 1), _SUBLANE)))
    # v7x: if everything would land in one tile but the batch is non-trivial,
    # split into two tiles so both TensorCores get work.  Rounding to 8 rows
    # keeps the wasted tail work negligible on single-TC chips too.
    if pl.cdiv(B, tile_b) == 1 and B >= 512:
        tile_b = _round_up(pl.cdiv(B, 2), _SUBLANE)
    return tile_b


def performance_predictor(x, prep, tile_b=1024):
    """x: [B, input_dim] (any float dtype; cast to bf16 inside the kernel).
    prep: output of prepare_params()."""
    w1, b1 = prep["w1"], prep["b1"]
    w2, b2 = prep["w2"], prep["b2"]
    w3, b3 = prep["w3"], prep["b3"]
    out_dim = prep["out_dim"]
    out_pad = w3.shape[1]

    B, d_in = x.shape
    tile_b = _choose_tile_b(B, tile_b)
    n_tiles = pl.cdiv(B, tile_b)   # boundary tile (if any) is masked by Pallas

    # Constant index_map => weights/biases are DMA'd once and stay VMEM-resident.
    resident = lambda a: pl.BlockSpec(a.shape, lambda i: (0, 0))

    out_padded = pl.pallas_call(
        _mlp_kernel,
        out_shape=jax.ShapeDtypeStruct((B, out_pad), jnp.float32),
        grid=(n_tiles,),
        in_specs=[
            pl.BlockSpec((tile_b, d_in), lambda i: (i, 0)),   # x: streams per tile
            resident(w1), resident(b1),
            resident(w2), resident(b2),
            resident(w3), resident(b3),
        ],
        out_specs=pl.BlockSpec((tile_b, out_pad), lambda i: (i, 0)),
        compiler_params=pltpu.CompilerParams(
            dimension_semantics=("parallel",),   # shard batch tiles across TCs (v7x)
            vmem_limit_bytes=32 << 20,
        ),
    )(x, w1, b1, w2, b2, w3, b3)

    return out_padded[:, :out_dim]


def init_params(key, input_dim=768, hidden_dim=512, output_dim=2):
    """Deterministic synthetic parameters (weights stored as [in, out])."""
    ks = jax.random.split(key, 6)
    h2 = hidden_dim // 2
    scale = 0.02
    return {
        "w1": scale * jax.random.normal(ks[0], (input_dim, hidden_dim), jnp.float32),
        "b1": scale * jax.random.normal(ks[1], (1, hidden_dim), jnp.float32),
        "w2": scale * jax.random.normal(ks[2], (hidden_dim, h2), jnp.float32),
        "b2": scale * jax.random.normal(ks[3], (1, h2), jnp.float32),
        "w3": scale * jax.random.normal(ks[4], (h2, output_dim), jnp.float32),
        "b3": scale * jax.random.normal(ks[5], (1, output_dim), jnp.float32),
    }


def _reference(x, p):
    """Pure-JAX reference mirroring the kernel's bf16-operand / f32-accumulate path."""
    bf = lambda a: a.astype(jnp.bfloat16)
    h1 = jnp.dot(bf(x), bf(p["w1"]), preferred_element_type=jnp.float32) + p["b1"]
    h1 = jnp.maximum(h1, 0.0)
    h2 = jnp.dot(bf(h1), bf(p["w2"]), preferred_element_type=jnp.float32) + p["b2"]
    h2 = jnp.maximum(h2, 0.0)
    return jnp.dot(bf(h2), bf(p["w3"]), preferred_element_type=jnp.float32) + p["b3"]


if __name__ == "__main__":
    key = jax.random.PRNGKey(0)
    k_x, k_p = jax.random.split(key)

    B, INPUT_DIM, HIDDEN_DIM, OUTPUT_DIM = 8, 768, 512, 2
    x = jax.random.normal(k_x, (B, INPUT_DIM), jnp.float32)
    params = init_params(k_p, INPUT_DIM, HIDDEN_DIM, OUTPUT_DIM)

    prep = prepare_params(params)           # one-time, load-time conversion
    y = performance_predictor(x, prep)
    y = jax.block_until_ready(y)

    y_ref = _reference(x, params)
    assert y.shape == (B, OUTPUT_DIM)
    assert jnp.allclose(y, y_ref, atol=1e-2, rtol=1e-2), (
        float(jnp.max(jnp.abs(y - y_ref))))

    print("KERNEL_OK")
</pallas_src>

<mosaic_0001>
module attributes {stable_mosaic.version = 11 : i64} {
  func.func @_mlp_kernel(%arg0: i32, %arg1: memref<8x768xf32, #tpu.memory_space<vmem>>, %arg2: memref<768x512xbf16, #tpu.memory_space<vmem>>, %arg3: memref<1x512xf32, #tpu.memory_space<vmem>>, %arg4: memref<512x256xbf16, #tpu.memory_space<vmem>>, %arg5: memref<1x256xf32, #tpu.memory_space<vmem>>, %arg6: memref<256x128xbf16, #tpu.memory_space<vmem>>, %arg7: memref<1x128xf32, #tpu.memory_space<vmem>>, %arg8: memref<8x128xf32, #tpu.memory_space<vmem>>) attributes {dimension_semantics = [#tpu.dimension_semantics<parallel>], iteration_bounds = array<i64: 1>, scalar_prefetch = 0 : i64, scratch_operands = 0 : i64, tpu.core_type = #tpu.core_type<tc>, window_params = [{transform_indices = @transform_0, window_bounds = array<i64: 8, 768>}, {pipeline_mode = #tpu.pipeline_mode<synchronous>, transform_indices = @transform_1, window_bounds = array<i64: 768, 512>}, {pipeline_mode = #tpu.pipeline_mode<synchronous>, transform_indices = @transform_2, window_bounds = array<i64: 1, 512>}, {pipeline_mode = #tpu.pipeline_mode<synchronous>, transform_indices = @transform_3, window_bounds = array<i64: 512, 256>}, {pipeline_mode = #tpu.pipeline_mode<synchronous>, transform_indices = @transform_4, window_bounds = array<i64: 1, 256>}, {pipeline_mode = #tpu.pipeline_mode<synchronous>, transform_indices = @transform_5, window_bounds = array<i64: 256, 128>}, {pipeline_mode = #tpu.pipeline_mode<synchronous>, transform_indices = @transform_6, window_bounds = array<i64: 1, 128>}, {transform_indices = @transform_7, window_bounds = array<i64: 8, 128>}]} {
    %c0 = arith.constant 0 : index
    %c0_0 = arith.constant 0 : index
    %0 = vector.load %arg1[%c0, %c0_0] : memref<8x768xf32, #tpu.memory_space<vmem>>, vector<8x768xf32>
    %1 = arith.truncf %0 : vector<8x768xf32> to vector<8x768xbf16>
    %c0_1 = arith.constant 0 : index
    %c0_2 = arith.constant 0 : index
    %2 = vector.load %arg2[%c0_1, %c0_2] : memref<768x512xbf16, #tpu.memory_space<vmem>>, vector<768x512xbf16>
    %cst = arith.constant dense<0.000000e+00> : vector<8x512xf32>
    %3 = tpu.matmul %1, %2, %cst {dimension_numbers = #tpu.dot_dimension_numbers<[1], [0], [0], [1], [0, 0, 1, 1], [], []>} : vector<8x768xbf16>, vector<768x512xbf16>, vector<8x512xf32> -> vector<8x512xf32>
    %c0_3 = arith.constant 0 : index
    %c0_4 = arith.constant 0 : index
    %4 = vector.load %arg3[%c0_3, %c0_4] : memref<1x512xf32, #tpu.memory_space<vmem>>, vector<1x512xf32>
    %5 = vector.broadcast %4 : vector<1x512xf32> to vector<8x512xf32>
    %6 = arith.addf %3, %5 : vector<8x512xf32>
    %cst_5 = arith.constant 0.000000e+00 : f32
    %7 = vector.broadcast %cst_5 : f32 to vector<8x512xf32>
    %8 = arith.maximumf %6, %7 : vector<8x512xf32>
    %9 = arith.truncf %8 : vector<8x512xf32> to vector<8x512xbf16>
    %c0_6 = arith.constant 0 : index
    %c0_7 = arith.constant 0 : index
    %10 = vector.load %arg4[%c0_6, %c0_7] : memref<512x256xbf16, #tpu.memory_space<vmem>>, vector<512x256xbf16>
    %cst_8 = arith.constant dense<0.000000e+00> : vector<8x256xf32>
    %11 = tpu.matmul %9, %10, %cst_8 {dimension_numbers = #tpu.dot_dimension_numbers<[1], [0], [0], [1], [0, 0, 1, 1], [], []>} : vector<8x512xbf16>, vector<512x256xbf16>, vector<8x256xf32> -> vector<8x256xf32>
    %c0_9 = arith.constant 0 : index
    %c0_10 = arith.constant 0 : index
    %12 = vector.load %arg5[%c0_9, %c0_10] : memref<1x256xf32, #tpu.memory_space<vmem>>, vector<1x256xf32>
    %13 = vector.broadcast %12 : vector<1x256xf32> to vector<8x256xf32>
    %14 = arith.addf %11, %13 : vector<8x256xf32>
    %cst_11 = arith.constant 0.000000e+00 : f32
    %15 = vector.broadcast %cst_11 : f32 to vector<8x256xf32>
    %16 = arith.maximumf %14, %15 : vector<8x256xf32>
    %17 = arith.truncf %16 : vector<8x256xf32> to vector<8x256xbf16>
    %c0_12 = arith.constant 0 : index
    %c0_13 = arith.constant 0 : index
    %18 = vector.load %arg6[%c0_12, %c0_13] : memref<256x128xbf16, #tpu.memory_space<vmem>>, vector<256x128xbf16>
    %cst_14 = arith.constant dense<0.000000e+00> : vector<8x128xf32>
    %19 = tpu.matmul %17, %18, %cst_14 {dimension_numbers = #tpu.dot_dimension_numbers<[1], [0], [0], [1], [0, 0, 1, 1], [], []>} : vector<8x256xbf16>, vector<256x128xbf16>, vector<8x128xf32> -> vector<8x128xf32>
    %c0_15 = arith.constant 0 : index
    %c0_16 = arith.constant 0 : index
    %20 = vector.load %arg7[%c0_15, %c0_16] : memref<1x128xf32, #tpu.memory_space<vmem>>, vector<1x128xf32>
    %21 = vector.broadcast %20 : vector<1x128xf32> to vector<8x128xf32>
    %22 = arith.addf %19, %21 : vector<8x128xf32>
    %c0_17 = arith.constant 0 : index
    %c0_18 = arith.constant 0 : index
    %23 = vector.load %arg8[%c0_17, %c0_18] : memref<8x128xf32, #tpu.memory_space<vmem>>, vector<8x128xf32>
    tpu.vector_store %arg8[%c0_17, %c0_18], %22 {strides = array<i32>} : memref<8x128xf32, #tpu.memory_space<vmem>>, vector<8x128xf32>,
    return
  }
  func.func @transform_0(%arg0: i32) -> (i32, i32) {
    %c0_i32 = arith.constant 0 : i32
    %c0_i32_0 = arith.constant 0 : i32
    return %arg0, %c0_i32 : i32, i32
  }
  func.func @transform_1(%arg0: i32) -> (i32, i32) {
    %c0_i32 = arith.constant 0 : i32
    %c0_i32_0 = arith.constant 0 : i32
    %c0_i32_1 = arith.constant 0 : i32
    return %c0_i32, %c0_i32_0 : i32, i32
  }
  func.func @transform_2(%arg0: i32) -> (i32, i32) {
    %c0_i32 = arith.constant 0 : i32
    %c0_i32_0 = arith.constant 0 : i32
    %c0_i32_1 = arith.constant 0 : i32
    return %c0_i32, %c0_i32_0 : i32, i32
  }
  func.func @transform_3(%arg0: i32) -> (i32, i32) {
    %c0_i32 = arith.constant 0 : i32
    %c0_i32_0 = arith.constant 0 : i32
    %c0_i32_1 = arith.constant 0 : i32
    return %c0_i32, %c0_i32_0 : i32, i32
  }
  func.func @transform_4(%arg0: i32) -> (i32, i32) {
    %c0_i32 = arith.constant 0 : i32
    %c0_i32_0 = arith.constant 0 : i32
    %c0_i32_1 = arith.constant 0 : i32
    return %c0_i32, %c0_i32_0 : i32, i32
  }
  func.func @transform_5(%arg0: i32) -> (i32, i32) {
    %c0_i32 = arith.constant 0 : i32
    %c0_i32_0 = arith.constant 0 : i32
    %c0_i32_1 = arith.constant 0 : i32
    return %c0_i32, %c0_i32_0 : i32, i32
  }
  func.func @transform_6(%arg0: i32) -> (i32, i32) {
    %c0_i32 = arith.constant 0 : i32
    %c0_i32_0 = arith.constant 0 : i32
    %c0_i32_1 = arith.constant 0 : i32
    return %c0_i32, %c0_i32_0 : i32, i32
  }
  func.func @transform_7(%arg0: i32) -> (i32, i32) {
    %c0_i32 = arith.constant 0 : i32
    %c0_i32_0 = arith.constant 0 : i32
    return %arg0, %c0_i32 : i32, i32
  }
}

</mosaic_0001>

<llo_original>
// kernel: tpu_custom_call.1
$region0: #{tpu_custom_call.1}
  #allocation0 [shape = 'u32[]', space=smem, size = 0x4, offset = 0x4, fixed_abs, tag = 'smem constant byte address 0x4 - core index']
  #allocation1 [shape = 'u32[144,128]{1,0:T(1,128)}', space=vmem, size = 0x12000, scoped, tag = 'internal scratch']
  %s0 = inlined_call_operand.hbm [shape: f32[8,768], index: 0, kind: input, shape index: {}]
  %s1 = inlined_call_operand.hbm [shape: bf16[768,512], index: 1, kind: input, shape index: {}]
  %s2 = inlined_call_operand.hbm [shape: f32[1,512], index: 2, kind: input, shape index: {}]
  %s3 = inlined_call_operand.hbm [shape: bf16[512,256], index: 3, kind: input, shape index: {}]
  %s4 = inlined_call_operand.vmem [shape: f32[1,256], index: 4, kind: input, shape index: {}]
  %s5 = inlined_call_operand.hbm [shape: bf16[256,128], index: 5, kind: input, shape index: {}]
  %s6 = inlined_call_operand.vmem [shape: f32[1,128], index: 6, kind: input, shape index: {}]
  %s7 = inlined_call_operand.hbm [shape: f32[8,128], index: 7, kind: output, shape index: {}]
  %s8 = sld [smem:[#allocation0]]
  $region58: #{tpu_custom_call.1} parent=0
    _
  %s10 = ssub.s32 1, %s8
  %s11 = scalar_select 0, %s10, %s8
  $region1: #{tpu_custom_call.1} parent=0
    #allocation2 [shape = 'u8[24576]{0}', space=vmem, size = 0x6000, scoped, tag = 'input window, operand 0, single buffered']
    #allocation3 [shape = 's32[1]{0}', space=sflag, size = 0x4, scoped, tag = 'scoped memory for tpu_custom_call.1']
    #allocation4 [shape = 's32[1]{0}', space=sflag, size = 0x4, scoped, tag = 'scoped memory for tpu_custom_call.1']
    #allocation5 [shape = 'u8[786432]{0}', space=vmem, size = 0xc0000, scoped, tag = 'input window, operand 1, single buffered']
    #allocation6 [shape = 's32[1]{0}', space=sflag, size = 0x4, scoped, tag = 'scoped memory for tpu_custom_call.1']
    #allocation7 [shape = 'u8[2048]{0}', space=vmem, size = 0x800, scoped, tag = 'input window, operand 2, single buffered']
    #allocation8 [shape = 'u8[262144]{0}', space=vmem, size = 0x40000, scoped, tag = 'input window, operand 3, single buffered']
    #allocation9 [shape = 's32[1]{0}', space=sflag, size = 0x4, scoped, tag = 'scoped memory for tpu_custom_call.1']
    #allocation10 [shape = 'u8[65536]{0}', space=vmem, size = 0x10000, scoped, tag = 'input window, operand 5, single buffered']
    #allocation11 [shape = 'u8[4096]{0}', space=vmem, size = 0x1000, scoped, tag = 'output window, operand 0, single buffered']
    %12 = vsyncpa [#allocation3], 0
    %13 = vsyncpa [#allocation6], 0
    %14 = vsyncpa [#allocation9], 0
    %15 = vsyncpa [#allocation4], 0
    // Predicated region
    $region2: #{tpu_custom_call.1} parent=1 // pred_check
      _
    $region3: #{tpu_custom_call.1} parent=1 // pred_check_branch
      %17 = sbr.rel (0) target = $region5
    $region4: #{tpu_custom_call.1} parent=1 // pred_region
      %s19 = ssub.s32 768, 768
      %20 = vsyncadd [#allocation3], %s19
      %s22 = sshll.u32 [#allocation2], 4
      %s23 = int_to_ptr.vmem [resolvable:$true] %s22
      %25 = dma.hbm_to_vmem [thread:$0]  %s0, 768, %s23, [#allocation3]
    $region5: #{tpu_custom_call.1} parent=1 // pred_fallthru
      _
    // Predicated region
    $region6: #{tpu_custom_call.1} parent=1 // pred_check
      _
    $region7: #{tpu_custom_call.1} parent=1 // pred_check_branch
      %27 = sbr.rel (0) target = $region9
    $region8: #{tpu_custom_call.1} parent=1 // pred_region
      %s29 = ssub.s32 24576, 24576
      %30 = vsyncadd [#allocation6], %s29
      %s31 = sshll.u32 [#allocation5], 4
      %s32 = int_to_ptr.vmem [resolvable:$true] %s31
      %37 = dma.hbm_to_vmem [thread:$0]  %s1, 24576, %s32, [#allocation6], 256, 256, 16
    $region9: #{tpu_custom_call.1} parent=1 // pred_fallthru
      _
    // Predicated region
    $region10: #{tpu_custom_call.1} parent=1 // pred_check
      _
    $region11: #{tpu_custom_call.1} parent=1 // pred_check_branch
      %39 = sbr.rel (0) target = $region13
    $region12: #{tpu_custom_call.1} parent=1 // pred_region
      %s41 = ssub.s32 64, 64
      %42 = vsyncadd [#allocation6], %s41
      %s44 = sshll.u32 [#allocation7], 4
      %s45 = int_to_ptr.vmem [resolvable:$true] %s44
      %47 = dma.hbm_to_vmem [thread:$0]  %s2, 64, %s45, [#allocation6]
    $region13: #{tpu_custom_call.1} parent=1 // pred_fallthru
      _
    // Predicated region
    $region14: #{tpu_custom_call.1} parent=1 // pred_check
      _
    $region15: #{tpu_custom_call.1} parent=1 // pred_check_branch
      %49 = sbr.rel (0) target = $region17
    $region16: #{tpu_custom_call.1} parent=1 // pred_region
      %s51 = ssub.s32 8192, 8192
      %52 = vsyncadd [#allocation9], %s51
      %s53 = sshll.u32 [#allocation8], 4
      %s54 = int_to_ptr.vmem [resolvable:$true] %s53
      %59 = dma.hbm_to_vmem [thread:$0]  %s3, 8192, %s54, [#allocation9], 128, 128, 8
    $region17: #{tpu_custom_call.1} parent=1 // pred_fallthru
      _
    // Predicated region
    $region18: #{tpu_custom_call.1} parent=1 // pred_check
      _
    $region19: #{tpu_custom_call.1} parent=1 // pred_check_branch
      %61 = sbr.rel (0) target = $region21
    $region20: #{tpu_custom_call.1} parent=1 // pred_region
      _
    $region21: #{tpu_custom_call.1} parent=1 // pred_fallthru
      _
    // Predicated region
    $region22: #{tpu_custom_call.1} parent=1 // pred_check
      _
    $region23: #{tpu_custom_call.1} parent=1 // pred_check_branch
      %63 = sbr.rel (0) target = $region25
    $region24: #{tpu_custom_call.1} parent=1 // pred_region
      %s65 = ssub.s32 2048, 2048
      %66 = vsyncadd [#allocation9], %s65
      %s67 = sshll.u32 [#allocation10], 4
      %s68 = int_to_ptr.vmem [resolvable:$true] %s67
      %73 = dma.hbm_to_vmem [thread:$0]  %s5, 2048, %s68, [#allocation9], 64, 64, 4
    $region25: #{tpu_custom_call.1} parent=1 // pred_fallthru
      _
    // Predicated region
    $region26: #{tpu_custom_call.1} parent=1 // pred_check
      _
    $region27: #{tpu_custom_call.1} parent=1 // pred_check_branch
      %75 = sbr.rel (0) target = $region29
    $region28: #{tpu_custom_call.1} parent=1 // pred_region
      _
    $region29: #{tpu_custom_call.1} parent=1 // pred_fallthru
      _
    // Predicated region
    $region30: #{tpu_custom_call.1} parent=1 // pred_check
      _
    $region31: #{tpu_custom_call.1} parent=1 // pred_check_branch
      %77 = sbr.rel (0) target = $region33
    $region32: #{tpu_custom_call.1} parent=1 // pred_region
      %78 = dma.done [#allocation3], 768
    $region33: #{tpu_custom_call.1} parent=1 // pred_fallthru
      _
    // Predicated region
    $region34: #{tpu_custom_call.1} parent=1 // pred_check
      _
    $region35: #{tpu_custom_call.1} parent=1 // pred_check_branch
      %80 = sbr.rel (0) target = $region37
    $region36: #{tpu_custom_call.1} parent=1 // pred_region
      %81 = dma.done [#allocation6], 24576
    $region37: #{tpu_custom_call.1} parent=1 // pred_fallthru
      _
    // Predicated region
    $region38: #{tpu_custom_call.1} parent=1 // pred_check
      _
    $region39: #{tpu_custom_call.1} parent=1 // pred_check_branch
      %83 = sbr.rel (0) target = $region41
    $region40: #{tpu_custom_call.1} parent=1 // pred_region
      %84 = dma.done [#allocation6], 64
    $region41: #{tpu_custom_call.1} parent=1 // pred_fallthru
      _
    // Predicated region
    $region42: #{tpu_custom_call.1} parent=1 // pred_check
      _
    $region43: #{tpu_custom_call.1} parent=1 // pred_check_branch
      %86 = sbr.rel (0) target = $region45
    $region44: #{tpu_custom_call.1} parent=1 // pred_region
      %87 = dma.done [#allocation9], 8192
    $region45: #{tpu_custom_call.1} parent=1 // pred_fallthru
      _
    // Predicated region
    $region46: #{tpu_custom_call.1} parent=1 // pred_check
      _
    $region47: #{tpu_custom_call.1} parent=1 // pred_check_branch
      %89 = sbr.rel (0) target = $region49
    $region48: #{tpu_custom_call.1} parent=1 // pred_region
      %90 = dma.done [#allocation9], 2048
    $region49: #{tpu_custom_call.1} parent=1 // pred_fallthru
      _
    %v92 = vld [vmem:[#allocation2] sm:$0xff]
    %v93 = vld [vmem:[#allocation2 + $0x8] sm:$0xff]
    %v94 = vld [vmem:[#allocation2 + $0x10] sm:$0xff]
    %v95 = vld [vmem:[#allocation2 + $0x18] sm:$0xff]
    %v96 = vld [vmem:[#allocation2 + $0x20] sm:$0xff]
    %v97 = vld [vmem:[#allocation2 + $0x28] sm:$0xff]
    %v98 = vpack.c.bf16 %v92, %v92
    %v99 = vpack.c.bf16 %v93, %v93
    %v100 = vpack.c.bf16 %v94, %v94
    %v101 = vpack.c.bf16 %v95, %v95
    %v102 = vpack.c.bf16 %v96, %v96
    %v103 = vpack.c.bf16 %v97, %v97
    %v104 = vld [vmem:[#allocation5] sm:$0xff]
    %v105 = vld [vmem:[#allocation5 + $0x8] sm:$0xff]
    %v106 = vld [vmem:[#allocation5 + $0x10] sm:$0xff]
    %v107 = vld [vmem:[#allocation5 + $0x18] sm:$0xff]
    %v108 = vld [vmem:[#allocation5 + $0x20] sm:$0xff]
    %v109 = vld [vmem:[#allocation5 + $0x28] sm:$0xff]
    %v110 = vld [vmem:[#allocation5 + $0x30] sm:$0xff]
    %v111 = vld [vmem:[#allocation5 + $0x38] sm:$0xff]
    %v112 = vld [vmem:[#allocation5 + $0x40] sm:$0xff]
    %v113 = vld [vmem:[#allocation5 + $0x48] sm:$0xff]
    %v114 = vld [vmem:[#allocation5 + $0x50] sm:$0xff]
    %v115 = vld [vmem:[#allocation5 + $0x58] sm:$0xff]
    %v116 = vld [vmem:[#allocation5 + $0x60] sm:$0xff]
    %v117 = vld [vmem:[#allocation5 + $0x68] sm:$0xff]
    %v118 = vld [vmem:[#allocation5 + $0x70] sm:$0xff]
    %v119 = vld [vmem:[#allocation5 + $0x78] sm:$0xff]
    %v120 = vld [vmem:[#allocation5 + $0x80] sm:$0xff]
    %v121 = vld [vmem:[#allocation5 + $0x88] sm:$0xff]
    %v122 = vld [vmem:[#allocation5 + $0x90] sm:$0xff]
    %v123 = vld [vmem:[#allocation5 + $0x98] sm:$0xff]
    %v124 = vld [vmem:[#allocation5 + $0xa0] sm:$0xff]
    %v125 = vld [vmem:[#allocation5 + $0xa8] sm:$0xff]
    %v126 = vld [vmem:[#allocation5 + $0xb0] sm:$0xff]
    %v127 = vld [vmem:[#allocation5 + $0xb8] sm:$0xff]
    %v128 = vld [vmem:[#allocation5 + $0xc0] sm:$0xff]
    %v129 = vld [vmem:[#allocation5 + $0xc8] sm:$0xff]
    %v130 = vld [vmem:[#allocation5 + $0xd0] sm:$0xff]
    %v131 = vld [vmem:[#allocation5 + $0xd8] sm:$0xff]
    %v132 = vld [vmem:[#allocation5 + $0xe0] sm:$0xff]
    %v133 = vld [vmem:[#allocation5 + $0xe8] sm:$0xff]
    %v134 = vld [vmem:[#allocation5 + $0xf0] sm:$0xff]
    %v135 = vld [vmem:[#allocation5 + $0xf8] sm:$0xff]
    %v136 = vld [vmem:[#allocation5 + $0x100] sm:$0xff]
    %v137 = vld [vmem:[#allocation5 + $0x108] sm:$0xff]
    %v138 = vld [vmem:[#allocation5 + $0x110] sm:$0xff]
    %v139 = vld [vmem:[#allocation5 + $0x118] sm:$0xff]
    %v140 = vld [vmem:[#allocation5 + $0x120] sm:$0xff]
    %v141 = vld [vmem:[#allocation5 + $0x128] sm:$0xff]
    %v142 = vld [vmem:[#allocation5 + $0x130] sm:$0xff]
    %v143 = vld [vmem:[#allocation5 + $0x138] sm:$0xff]
    %v144 = vld [vmem:[#allocation5 + $0x140] sm:$0xff]
    %v145 = vld [vmem:[#allocation5 + $0x148] sm:$0xff]
    %v146 = vld [vmem:[#allocation5 + $0x150] sm:$0xff]
    %v147 = vld [vmem:[#allocation5 + $0x158] sm:$0xff]
    %v148 = vld [vmem:[#allocation5 + $0x160] sm:$0xff]
    %v149 = vld [vmem:[#allocation5 + $0x168] sm:$0xff]
    %v150 = vld [vmem:[#allocation5 + $0x170] sm:$0xff]
    %v151 = vld [vmem:[#allocation5 + $0x178] sm:$0xff]
    %v152 = vld [vmem:[#allocation5 + $0x180] sm:$0xff]
    %v153 = vld [vmem:[#allocation5 + $0x188] sm:$0xff]
    %v154 = vld [vmem:[#allocation5 + $0x190] sm:$0xff]
    %v155 = vld [vmem:[#allocation5 + $0x198] sm:$0xff]
    %v156 = vld [vmem:[#allocation5 + $0x1a0] sm:$0xff]
    %v157 = vld [vmem:[#allocation5 + $0x1a8] sm:$0xff]
    %v158 = vld [vmem:[#allocation5 + $0x1b0] sm:$0xff]
    %v159 = vld [vmem:[#allocation5 + $0x1b8] sm:$0xff]
    %v160 = vld [vmem:[#allocation5 + $0x1c0] sm:$0xff]
    %v161 = vld [vmem:[#allocation5 + $0x1c8] sm:$0xff]
    %v162 = vld [vmem:[#allocation5 + $0x1d0] sm:$0xff]
    %v163 = vld [vmem:[#allocation5 + $0x1d8] sm:$0xff]
    %v164 = vld [vmem:[#allocation5 + $0x1e0] sm:$0xff]
    %v165 = vld [vmem:[#allocation5 + $0x1e8] sm:$0xff]
    %v166 = vld [vmem:[#allocation5 + $0x1f0] sm:$0xff]
    %v167 = vld [vmem:[#allocation5 + $0x1f8] sm:$0xff]
    %v168 = vld [vmem:[#allocation5 + $0x200] sm:$0xff]
    %v169 = vld [vmem:[#allocation5 + $0x208] sm:$0xff]
    %v170 = vld [vmem:[#allocation5 + $0x210] sm:$0xff]
    %v171 = vld [vmem:[#allocation5 + $0x218] sm:$0xff]
    %v172 = vld [vmem:[#allocation5 + $0x220] sm:$0xff]
    %v173 = vld [vmem:[#allocation5 + $0x228] sm:$0xff]
    %v174 = vld [vmem:[#allocation5 + $0x230] sm:$0xff]
    %v175 = vld [vmem:[#allocation5 + $0x238] sm:$0xff]
    %v176 = vld [vmem:[#allocation5 + $0x240] sm:$0xff]
    %v177 = vld [vmem:[#allocation5 + $0x248] sm:$0xff]
    %v178 = vld [vmem:[#allocation5 + $0x250] sm:$0xff]
    %v179 = vld [vmem:[#allocation5 + $0x258] sm:$0xff]
    %v180 = vld [vmem:[#allocation5 + $0x260] sm:$0xff]
    %v181 = vld [vmem:[#allocation5 + $0x268] sm:$0xff]
    %v182 = vld [vmem:[#allocation5 + $0x270] sm:$0xff]
    %v183 = vld [vmem:[#allocation5 + $0x278] sm:$0xff]
    %v184 = vld [vmem:[#allocation5 + $0x280] sm:$0xff]
    %v185 = vld [vmem:[#allocation5 + $0x288] sm:$0xff]
    %v186 = vld [vmem:[#allocation5 + $0x290] sm:$0xff]
    %v187 = vld [vmem:[#allocation5 + $0x298] sm:$0xff]
    %v188 = vld [vmem:[#allocation5 + $0x2a0] sm:$0xff]
    %v189 = vld [vmem:[#allocation5 + $0x2a8] sm:$0xff]
    %v190 = vld [vmem:[#allocation5 + $0x2b0] sm:$0xff]
    %v191 = vld [vmem:[#allocation5 + $0x2b8] sm:$0xff]
    %v192 = vld [vmem:[#allocation5 + $0x2c0] sm:$0xff]
    %v193 = vld [vmem:[#allocation5 + $0x2c8] sm:$0xff]
    %v194 = vld [vmem:[#allocation5 + $0x2d0] sm:$0xff]
    %v195 = vld [vmem:[#allocation5 + $0x2d8] sm:$0xff]
    %v196 = vld [vmem:[#allocation5 + $0x2e0] sm:$0xff]
    %v197 = vld [vmem:[#allocation5 + $0x2e8] sm:$0xff]
    %v198 = vld [vmem:[#allocation5 + $0x2f0] sm:$0xff]
    %v199 = vld [vmem:[#allocation5 + $0x2f8] sm:$0xff]
    %v200 = vld [vmem:[#allocation5 + $0x300] sm:$0xff]
    %v201 = vld [vmem:[#allocation5 + $0x308] sm:$0xff]
    %v202 = vld [vmem:[#allocation5 + $0x310] sm:$0xff]
    %v203 = vld [vmem:[#allocation5 + $0x318] sm:$0xff]
    %v204 = vld [vmem:[#allocation5 + $0x320] sm:$0xff]
    %v205 = vld [vmem:[#allocation5 + $0x328] sm:$0xff]
    %v206 = vld [vmem:[#allocation5 + $0x330] sm:$0xff]
    %v207 = vld [vmem:[#allocation5 + $0x338] sm:$0xff]
    %v208 = vld [vmem:[#allocation5 + $0x340] sm:$0xff]
    %v209 = vld [vmem:[#allocation5 + $0x348] sm:$0xff]
    %v210 = vld [vmem:[#allocation5 + $0x350] sm:$0xff]
    %v211 = vld [vmem:[#allocation5 + $0x358] sm:$0xff]
    %v212 = vld [vmem:[#allocation5 + $0x360] sm:$0xff]
    %v213 = vld [vmem:[#allocation5 + $0x368] sm:$0xff]
    %v214 = vld [vmem:[#allocation5 + $0x370] sm:$0xff]
    %v215 = vld [vmem:[#allocation5 + $0x378] sm:$0xff]
    %v216 = vld [vmem:[#allocation5 + $0x380] sm:$0xff]
    %v217 = vld [vmem:[#allocation5 + $0x388] sm:$0xff]
    %v218 = vld [vmem:[#allocation5 + $0x390] sm:$0xff]
    %v219 = vld [vmem:[#allocation5 + $0x398] sm:$0xff]
    %v220 = vld [vmem:[#allocation5 + $0x3a0] sm:$0xff]
    %v221 = vld [vmem:[#allocation5 + $0x3a8] sm:$0xff]
    %v222 = vld [vmem:[#allocation5 + $0x3b0] sm:$0xff]
    %v223 = vld [vmem:[#allocation5 + $0x3b8] sm:$0xff]
    %v224 = vld [vmem:[#allocation5 + $0x3c0] sm:$0xff]
    %v225 = vld [vmem:[#allocation5 + $0x3c8] sm:$0xff]
    %v226 = vld [vmem:[#allocation5 + $0x3d0] sm:$0xff]
    %v227 = vld [vmem:[#allocation5 + $0x3d8] sm:$0xff]
    %v228 = vld [vmem:[#allocation5 + $0x3e0] sm:$0xff]
    %v229 = vld [vmem:[#allocation5 + $0x3e8] sm:$0xff]
    %v230 = vld [vmem:[#allocation5 + $0x3f0] sm:$0xff]
    %v231 = vld [vmem:[#allocation5 + $0x3f8] sm:$0xff]
    %v232 = vld [vmem:[#allocation5 + $0x400] sm:$0xff]
    %v233 = vld [vmem:[#allocation5 + $0x408] sm:$0xff]
    %v234 = vld [vmem:[#allocation5 + $0x410] sm:$0xff]
    %v235 = vld [vmem:[#allocation5 + $0x418] sm:$0xff]
    %v236 = vld [vmem:[#allocation5 + $0x420] sm:$0xff]
    %v237 = vld [vmem:[#allocation5 + $0x428] sm:$0xff]
    %v238 = vld [vmem:[#allocation5 + $0x430] sm:$0xff]
    %v239 = vld [vmem:[#allocation5 + $0x438] sm:$0xff]
    %v240 = vld [vmem:[#allocation5 + $0x440] sm:$0xff]
    %v241 = vld [vmem:[#allocation5 + $0x448] sm:$0xff]
    %v242 = vld [vmem:[#allocation5 + $0x450] sm:$0xff]
    %v243 = vld [vmem:[#allocation5 + $0x458] sm:$0xff]
    %v244 = vld [vmem:[#allocation5 + $0x460] sm:$0xff]
    %v245 = vld [vmem:[#allocation5 + $0x468] sm:$0xff]
    %v246 = vld [vmem:[#allocation5 + $0x470] sm:$0xff]
    %v247 = vld [vmem:[#allocation5 + $0x478] sm:$0xff]
    %v248 = vld [vmem:[#allocation5 + $0x480] sm:$0xff]
    %v249 = vld [vmem:[#allocation5 + $0x488] sm:$0xff]
    %v250 = vld [vmem:[#allocation5 + $0x490] sm:$0xff]
    %v251 = vld [vmem:[#allocation5 + $0x498] sm:$0xff]
    %v252 = vld [vmem:[#allocation5 + $0x4a0] sm:$0xff]
    %v253 = vld [vmem:[#allocation5 + $0x4a8] sm:$0xff]
    %v254 = vld [vmem:[#allocation5 + $0x4b0] sm:$0xff]
    %v255 = vld [vmem:[#allocation5 + $0x4b8] sm:$0xff]
    %v256 = vld [vmem:[#allocation5 + $0x4c0] sm:$0xff]
    %v257 = vld [vmem:[#allocation5 + $0x4c8] sm:$0xff]
    %v258 = vld [vmem:[#allocation5 + $0x4d0] sm:$0xff]
    %v259 = vld [vmem:[#allocation5 + $0x4d8] sm:$0xff]
    %v260 = vld [vmem:[#allocation5 + $0x4e0] sm:$0xff]
    %v261 = vld [vmem:[#allocation5 + $0x4e8] sm:$0xff]
    %v262 = vld [vmem:[#allocation5 + $0x4f0] sm:$0xff]
    %v263 = vld [vmem:[#allocation5 + $0x4f8] sm:$0xff]
    %v264 = vld [vmem:[#allocation5 + $0x500] sm:$0xff]
    %v265 = vld [vmem:[#allocation5 + $0x508] sm:$0xff]
    %v266 = vld [vmem:[#allocation5 + $0x510] sm:$0xff]
    %v267 = vld [vmem:[#allocation5 + $0x518] sm:$0xff]
    %v268 = vld [vmem:[#allocation5 + $0x520] sm:$0xff]
    %v269 = vld [vmem:[#allocation5 + $0x528] sm:$0xff]
    %v270 = vld [vmem:[#allocation5 + $0x530] sm:$0xff]
    %v271 = vld [vmem:[#allocation5 + $0x538] sm:$0xff]
    %v272 = vld [vmem:[#allocation5 + $0x540] sm:$0xff]
    %v273 = vld [vmem:[#allocation5 + $0x548] sm:$0xff]
    %v274 = vld [vmem:[#allocation5 + $0x550] sm:$0xff]
    %v275 = vld [vmem:[#allocation5 + $0x558] sm:$0xff]
    %v276 = vld [vmem:[#allocation5 + $0x560] sm:$0xff]
    %v277 = vld [vmem:[#allocation5 + $0x568] sm:$0xff]
    %v278 = vld [vmem:[#allocation5 + $0x570] sm:$0xff]
    %v279 = vld [vmem:[#allocation5 + $0x578] sm:$0xff]
    %v280 = vld [vmem:[#allocation5 + $0x580] sm:$0xff]
    %v281 = vld [vmem:[#allocation5 + $0x588] sm:$0xff]
    %v282 = vld [vmem:[#allocation5 + $0x590] sm:$0xff]
    %v283 = vld [vmem:[#allocation5 + $0x598] sm:$0xff]
    %v284 = vld [vmem:[#allocation5 + $0x5a0] sm:$0xff]
    %v285 = vld [vmem:[#allocation5 + $0x5a8] sm:$0xff]
    %v286 = vld [vmem:[#allocation5 + $0x5b0] sm:$0xff]
    %v287 = vld [vmem:[#allocation5 + $0x5b8] sm:$0xff]
    %v288 = vld [vmem:[#allocation5 + $0x5c0] sm:$0xff]
    %v289 = vld [vmem:[#allocation5 + $0x5c8] sm:$0xff]
    %v290 = vld [vmem:[#allocation5 + $0x5d0] sm:$0xff]
    %v291 = vld [vmem:[#allocation5 + $0x5d8] sm:$0xff]
    %v292 = vld [vmem:[#allocation5 + $0x5e0] sm:$0xff]
    %v293 = vld [vmem:[#allocation5 + $0x5e8] sm:$0xff]
    %v294 = vld [vmem:[#allocation5 + $0x5f0] sm:$0xff]
    %v295 = vld [vmem:[#allocation5 + $0x5f8] sm:$0xff]
    %v296 = vld [vmem:[#allocation7] sm:$0xf]
    %v298 = vlaneseq
    %v299 = vshrl.u32 %v298, 7
    %v300 = vsub.s32 0, %v299
    %v301 = vrot.slane %v296, %v300
    %v302 = vlaneseq
    %v303 = vshrl.u32 %v302, 7
    %v304 = vsub.s32 1, %v303
    %v305 = vrot.slane %v296, %v304
    %v306 = vlaneseq
    %v307 = vshrl.u32 %v306, 7
    %v308 = vsub.s32 2, %v307
    %v309 = vrot.slane %v296, %v308
    %v310 = vlaneseq
    %v311 = vshrl.u32 %v310, 7
    %v312 = vsub.s32 3, %v311
    %v313 = vrot.slane %v296, %v312
    %v510 = vunpack.c.l.b16 %v104
    %v511 = vunpack.c.h.b16 %v104
    %v512 = vunpack.c.l.b16 %v105
    %v513 = vunpack.c.h.b16 %v105
    %v514 = vunpack.c.l.b16 %v106
    %v515 = vunpack.c.h.b16 %v106
    %v516 = vunpack.c.l.b16 %v107
    %v517 = vunpack.c.h.b16 %v107
    %v518 = vunpack.c.l.b16 %v108
    %v519 = vunpack.c.h.b16 %v108
    %v520 = vunpack.c.l.b16 %v109
    %v521 = vunpack.c.h.b16 %v109
    %v522 = vunpack.c.l.b16 %v110
    %v523 = vunpack.c.h.b16 %v110
    %v524 = vunpack.c.l.b16 %v111
    %v525 = vunpack.c.h.b16 %v111
    %v526 = vunpack.c.l.b16 %v112
    %v527 = vunpack.c.h.b16 %v112
    %v528 = vunpack.c.l.b16 %v113
    %v529 = vunpack.c.h.b16 %v113
    %v530 = vunpack.c.l.b16 %v114
    %v531 = vunpack.c.h.b16 %v114
    %v532 = vunpack.c.l.b16 %v115
    %v533 = vunpack.c.h.b16 %v115
    %v534 = vunpack.c.l.b16 %v116
    %v535 = vunpack.c.h.b16 %v116
    %v536 = vunpack.c.l.b16 %v117
    %v537 = vunpack.c.h.b16 %v117
    %v538 = vunpack.c.l.b16 %v118
    %v539 = vunpack.c.h.b16 %v118
    %v540 = vunpack.c.l.b16 %v119
    %v541 = vunpack.c.h.b16 %v119
    %v542 = vunpack.c.l.b16 %v120
    %v543 = vunpack.c.h.b16 %v120
    %v544 = vunpack.c.l.b16 %v121
    %v545 = vunpack.c.h.b16 %v121
    %v546 = vunpack.c.l.b16 %v122
    %v547 = vunpack.c.h.b16 %v122
    %v548 = vunpack.c.l.b16 %v123
    %v549 = vunpack.c.h.b16 %v123
    %v550 = vunpack.c.l.b16 %v124
    %v551 = vunpack.c.h.b16 %v124
    %v552 = vunpack.c.l.b16 %v125
    %v553 = vunpack.c.h.b16 %v125
    %v554 = vunpack.c.l.b16 %v126
    %v555 = vunpack.c.h.b16 %v126
    %v556 = vunpack.c.l.b16 %v127
    %v557 = vunpack.c.h.b16 %v127
    %v558 = vunpack.c.l.b16 %v128
    %v559 = vunpack.c.h.b16 %v128
    %v560 = vunpack.c.l.b16 %v129
    %v561 = vunpack.c.h.b16 %v129
    %v562 = vunpack.c.l.b16 %v130
    %v563 = vunpack.c.h.b16 %v130
    %v564 = vunpack.c.l.b16 %v131
    %v565 = vunpack.c.h.b16 %v131
    %v566 = vunpack.c.l.b16 %v132
    %v567 = vunpack.c.h.b16 %v132
    %v568 = vunpack.c.l.b16 %v133
    %v569 = vunpack.c.h.b16 %v133
    %v570 = vunpack.c.l.b16 %v134
    %v571 = vunpack.c.h.b16 %v134
    %v572 = vunpack.c.l.b16 %v135
    %v573 = vunpack.c.h.b16 %v135
    %v574 = vunpack.c.l.b16 %v136
    %v575 = vunpack.c.h.b16 %v136
    %v576 = vunpack.c.l.b16 %v137
    %v577 = vunpack.c.h.b16 %v137
    %v578 = vunpack.c.l.b16 %v138
    %v579 = vunpack.c.h.b16 %v138
    %v580 = vunpack.c.l.b16 %v139
    %v581 = vunpack.c.h.b16 %v139
    %v582 = vunpack.c.l.b16 %v140
    %v583 = vunpack.c.h.b16 %v140
    %v584 = vunpack.c.l.b16 %v141
    %v585 = vunpack.c.h.b16 %v141
    %v586 = vunpack.c.l.b16 %v142
    %v587 = vunpack.c.h.b16 %v142
    %v588 = vunpack.c.l.b16 %v143
    %v589 = vunpack.c.h.b16 %v143
    %v590 = vunpack.c.l.b16 %v144
    %v591 = vunpack.c.h.b16 %v144
    %v592 = vunpack.c.l.b16 %v145
    %v593 = vunpack.c.h.b16 %v145
    %v594 = vunpack.c.l.b16 %v146
    %v595 = vunpack.c.h.b16 %v146
    %v596 = vunpack.c.l.b16 %v147
    %v597 = vunpack.c.h.b16 %v147
    %v598 = vunpack.c.l.b16 %v148
    %v599 = vunpack.c.h.b16 %v148
    %v600 = vunpack.c.l.b16 %v149
    %v601 = vunpack.c.h.b16 %v149
    %v602 = vunpack.c.l.b16 %v150
    %v603 = vunpack.c.h.b16 %v150
    %v604 = vunpack.c.l.b16 %v151
    %v605 = vunpack.c.h.b16 %v151
    %v606 = vunpack.c.l.b16 %v152
    %v607 = vunpack.c.h.b16 %v152
    %v608 = vunpack.c.l.b16 %v153
    %v609 = vunpack.c.h.b16 %v153
    %v610 = vunpack.c.l.b16 %v154
    %v611 = vunpack.c.h.b16 %v154
    %v612 = vunpack.c.l.b16 %v155
    %v613 = vunpack.c.h.b16 %v155
    %v614 = vunpack.c.l.b16 %v156
    %v615 = vunpack.c.h.b16 %v156
    %v616 = vunpack.c.l.b16 %v157
    %v617 = vunpack.c.h.b16 %v157
    %v618 = vunpack.c.l.b16 %v158
    %v619 = vunpack.c.h.b16 %v158
    %v620 = vunpack.c.l.b16 %v159
    %v621 = vunpack.c.h.b16 %v159
    %v622 = vunpack.c.l.b16 %v160
    %v623 = vunpack.c.h.b16 %v160
    %v624 = vunpack.c.l.b16 %v161
    %v625 = vunpack.c.h.b16 %v161
    %v626 = vunpack.c.l.b16 %v162
    %v627 = vunpack.c.h.b16 %v162
    %v628 = vunpack.c.l.b16 %v163
    %v629 = vunpack.c.h.b16 %v163
    %v630 = vunpack.c.l.b16 %v164
    %v631 = vunpack.c.h.b16 %v164
    %v632 = vunpack.c.l.b16 %v165
    %v633 = vunpack.c.h.b16 %v165
    %v634 = vunpack.c.l.b16 %v166
    %v635 = vunpack.c.h.b16 %v166
    %v636 = vunpack.c.l.b16 %v167
    %v637 = vunpack.c.h.b16 %v167
    %v638 = vunpack.c.l.b16 %v168
    %v639 = vunpack.c.h.b16 %v168
    %v640 = vunpack.c.l.b16 %v169
    %v641 = vunpack.c.h.b16 %v169
    %v642 = vunpack.c.l.b16 %v170
    %v643 = vunpack.c.h.b16 %v170
    %v644 = vunpack.c.l.b16 %v171
    %v645 = vunpack.c.h.b16 %v171
    %v646 = vunpack.c.l.b16 %v172
    %v647 = vunpack.c.h.b16 %v172
    %v648 = vunpack.c.l.b16 %v173
    %v649 = vunpack.c.h.b16 %v173
    %v650 = vunpack.c.l.b16 %v174
    %v651 = vunpack.c.h.b16 %v174
    %v652 = vunpack.c.l.b16 %v175
    %v653 = vunpack.c.h.b16 %v175
    %v654 = vunpack.c.l.b16 %v176
    %v655 = vunpack.c.h.b16 %v176
    %v656 = vunpack.c.l.b16 %v177
    %v657 = vunpack.c.h.b16 %v177
    %v658 = vunpack.c.l.b16 %v178
    %v659 = vunpack.c.h.b16 %v178
    %v660 = vunpack.c.l.b16 %v179
    %v661 = vunpack.c.h.b16 %v179
    %v662 = vunpack.c.l.b16 %v180
    %v663 = vunpack.c.h.b16 %v180
    %v664 = vunpack.c.l.b16 %v181
    %v665 = vunpack.c.h.b16 %v181
    %v666 = vunpack.c.l.b16 %v182
    %v667 = vunpack.c.h.b16 %v182
    %v668 = vunpack.c.l.b16 %v183
    %v669 = vunpack.c.h.b16 %v183
    %v670 = vunpack.c.l.b16 %v184
    %v671 = vunpack.c.h.b16 %v184
    %v672 = vunpack.c.l.b16 %v185
    %v673 = vunpack.c.h.b16 %v185
    %v674 = vunpack.c.l.b16 %v186
    %v675 = vunpack.c.h.b16 %v186
    %v676 = vunpack.c.l.b16 %v187
    %v677 = vunpack.c.h.b16 %v187
    %v678 = vunpack.c.l.b16 %v188
    %v679 = vunpack.c.h.b16 %v188
    %v680 = vunpack.c.l.b16 %v189
    %v681 = vunpack.c.h.b16 %v189
    %v682 = vunpack.c.l.b16 %v190
    %v683 = vunpack.c.h.b16 %v190
    %v684 = vunpack.c.l.b16 %v191
    %v685 = vunpack.c.h.b16 %v191
    %v686 = vunpack.c.l.b16 %v192
    %v687 = vunpack.c.h.b16 %v192
    %v688 = vunpack.c.l.b16 %v193
    %v689 = vunpack.c.h.b16 %v193
    %v690 = vunpack.c.l.b16 %v194
    %v691 = vunpack.c.h.b16 %v194
    %v692 = vunpack.c.l.b16 %v195
    %v693 = vunpack.c.h.b16 %v195
    %v694 = vunpack.c.l.b16 %v196
    %v695 = vunpack.c.h.b16 %v196
    %v696 = vunpack.c.l.b16 %v197
    %v697 = vunpack.c.h.b16 %v197
    %v698 = vunpack.c.l.b16 %v198
    %v699 = vunpack.c.h.b16 %v198
    %v700 = vunpack.c.l.b16 %v199
    %v701 = vunpack.c.h.b16 %v199
    %v702 = vunpack.c.l.b16 %v200
    %v703 = vunpack.c.h.b16 %v200
    %v704 = vunpack.c.l.b16 %v201
    %v705 = vunpack.c.h.b16 %v201
    %v706 = vunpack.c.l.b16 %v202
    %v707 = vunpack.c.h.b16 %v202
    %v708 = vunpack.c.l.b16 %v203
    %v709 = vunpack.c.h.b16 %v203
    %v710 = vunpack.c.l.b16 %v204
    %v711 = vunpack.c.h.b16 %v204
    %v712 = vunpack.c.l.b16 %v205
    %v713 = vunpack.c.h.b16 %v205
    %v714 = vunpack.c.l.b16 %v206
    %v715 = vunpack.c.h.b16 %v206
    %v716 = vunpack.c.l.b16 %v207
    %v717 = vunpack.c.h.b16 %v207
    %v718 = vunpack.c.l.b16 %v208
    %v719 = vunpack.c.h.b16 %v208
    %v720 = vunpack.c.l.b16 %v209
    %v721 = vunpack.c.h.b16 %v209
    %v722 = vunpack.c.l.b16 %v210
    %v723 = vunpack.c.h.b16 %v210
    %v724 = vunpack.c.l.b16 %v211
    %v725 = vunpack.c.h.b16 %v211
    %v726 = vunpack.c.l.b16 %v212
    %v727 = vunpack.c.h.b16 %v212
    %v728 = vunpack.c.l.b16 %v213
    %v729 = vunpack.c.h.b16 %v213
    %v730 = vunpack.c.l.b16 %v214
    %v731 = vunpack.c.h.b16 %v214
    %v732 = vunpack.c.l.b16 %v215
    %v733 = vunpack.c.h.b16 %v215
    %v734 = vunpack.c.l.b16 %v216
    %v735 = vunpack.c.h.b16 %v216
    %v736 = vunpack.c.l.b16 %v217
    %v737 = vunpack.c.h.b16 %v217
    %v738 = vunpack.c.l.b16 %v218
    %v739 = vunpack.c.h.b16 %v218
    %v740 = vunpack.c.l.b16 %v219
    %v741 = vunpack.c.h.b16 %v219
    %v742 = vunpack.c.l.b16 %v220
    %v743 = vunpack.c.h.b16 %v220
    %v744 = vunpack.c.l.b16 %v221
    %v745 = vunpack.c.h.b16 %v221
    %v746 = vunpack.c.l.b16 %v222
    %v747 = vunpack.c.h.b16 %v222
    %v748 = vunpack.c.l.b16 %v223
    %v749 = vunpack.c.h.b16 %v223
    %v750 = vunpack.c.l.b16 %v224
    %v751 = vunpack.c.h.b16 %v224
    %v752 = vunpack.c.l.b16 %v225
    %v753 = vunpack.c.h.b16 %v225
    %v754 = vunpack.c.l.b16 %v226
    %v755 = vunpack.c.h.b16 %v226
    %v756 = vunpack.c.l.b16 %v227
    %v757 = vunpack.c.h.b16 %v227
    %v758 = vunpack.c.l.b16 %v228
    %v759 = vunpack.c.h.b16 %v228
    %v760 = vunpack.c.l.b16 %v229
    %v761 = vunpack.c.h.b16 %v229
    %v762 = vunpack.c.l.b16 %v230
    %v763 = vunpack.c.h.b16 %v230
    %v764 = vunpack.c.l.b16 %v231
    %v765 = vunpack.c.h.b16 %v231
    %v766 = vunpack.c.l.b16 %v232
    %v767 = vunpack.c.h.b16 %v232
    %v768 = vunpack.c.l.b16 %v233
    %v769 = vunpack.c.h.b16 %v233
    %v770 = vunpack.c.l.b16 %v234
    %v771 = vunpack.c.h.b16 %v234
    %v772 = vunpack.c.l.b16 %v235
    %v773 = vunpack.c.h.b16 %v235
    %v774 = vunpack.c.l.b16 %v236
    %v775 = vunpack.c.h.b16 %v236
    %v776 = vunpack.c.l.b16 %v237
    %v777 = vunpack.c.h.b16 %v237
    %v778 = vunpack.c.l.b16 %v238
    %v779 = vunpack.c.h.b16 %v238
    %v780 = vunpack.c.l.b16 %v239
    %v781 = vunpack.c.h.b16 %v239
    %v782 = vunpack.c.l.b16 %v240
    %v783 = vunpack.c.h.b16 %v240
    %v784 = vunpack.c.l.b16 %v241
    %v785 = vunpack.c.h.b16 %v241
    %v786 = vunpack.c.l.b16 %v242
    %v787 = vunpack.c.h.b16 %v242
    %v788 = vunpack.c.l.b16 %v243
    %v789 = vunpack.c.h.b16 %v243
    %v790 = vunpack.c.l.b16 %v244
    %v791 = vunpack.c.h.b16 %v244
    %v792 = vunpack.c.l.b16 %v245
    %v793 = vunpack.c.h.b16 %v245
    %v794 = vunpack.c.l.b16 %v246
    %v795 = vunpack.c.h.b16 %v246
    %v796 = vunpack.c.l.b16 %v247
    %v797 = vunpack.c.h.b16 %v247
    %v798 = vunpack.c.l.b16 %v248
    %v799 = vunpack.c.h.b16 %v248
    %v800 = vunpack.c.l.b16 %v249
    %v801 = vunpack.c.h.b16 %v249
    %v802 = vunpack.c.l.b16 %v250
    %v803 = vunpack.c.h.b16 %v250
    %v804 = vunpack.c.l.b16 %v251
    %v805 = vunpack.c.h.b16 %v251
    %v806 = vunpack.c.l.b16 %v252
    %v807 = vunpack.c.h.b16 %v252
    %v808 = vunpack.c.l.b16 %v253
    %v809 = vunpack.c.h.b16 %v253
    %v810 = vunpack.c.l.b16 %v254
    %v811 = vunpack.c.h.b16 %v254
    %v812 = vunpack.c.l.b16 %v255
    %v813 = vunpack.c.h.b16 %v255
    %v814 = vunpack.c.l.b16 %v256
    %v815 = vunpack.c.h.b16 %v256
    %v816 = vunpack.c.l.b16 %v257
    %v817 = vunpack.c.h.b16 %v257
    %v818 = vunpack.c.l.b16 %v258
    %v819 = vunpack.c.h.b16 %v258
    %v820 = vunpack.c.l.b16 %v259
    %v821 = vunpack.c.h.b16 %v259
    %v822 = vunpack.c.l.b16 %v260
    %v823 = vunpack.c.h.b16 %v260
    %v824 = vunpack.c.l.b16 %v261
    %v825 = vunpack.c.h.b16 %v261
    %v826 = vunpack.c.l.b16 %v262
    %v827 = vunpack.c.h.b16 %v262
    %v828 = vunpack.c.l.b16 %v263
    %v829 = vunpack.c.h.b16 %v263
    %v830 = vunpack.c.l.b16 %v264
    %v831 = vunpack.c.h.b16 %v264
    %v832 = vunpack.c.l.b16 %v265
    %v833 = vunpack.c.h.b16 %v265
    %v834 = vunpack.c.l.b16 %v266
    %v835 = vunpack.c.h.b16 %v266
    %v836 = vunpack.c.l.b16 %v267
    %v837 = vunpack.c.h.b16 %v267
    %v838 = vunpack.c.l.b16 %v268
    %v839 = vunpack.c.h.b16 %v268
    %v840 = vunpack.c.l.b16 %v269
    %v841 = vunpack.c.h.b16 %v269
    %v842 = vunpack.c.l.b16 %v270
    %v843 = vunpack.c.h.b16 %v270
    %v844 = vunpack.c.l.b16 %v271
    %v845 = vunpack.c.h.b16 %v271
    %v846 = vunpack.c.l.b16 %v272
    %v847 = vunpack.c.h.b16 %v272
    %v848 = vunpack.c.l.b16 %v273
    %v849 = vunpack.c.h.b16 %v273
    %v850 = vunpack.c.l.b16 %v274
    %v851 = vunpack.c.h.b16 %v274
    %v852 = vunpack.c.l.b16 %v275
    %v853 = vunpack.c.h.b16 %v275
    %v854 = vunpack.c.l.b16 %v276
    %v855 = vunpack.c.h.b16 %v276
    %v856 = vunpack.c.l.b16 %v277
    %v857 = vunpack.c.h.b16 %v277
    %v858 = vunpack.c.l.b16 %v278
    %v859 = vunpack.c.h.b16 %v278
    %v860 = vunpack.c.l.b16 %v279
    %v861 = vunpack.c.h.b16 %v279
    %v862 = vunpack.c.l.b16 %v280
    %v863 = vunpack.c.h.b16 %v280
    %v864 = vunpack.c.l.b16 %v281
    %v865 = vunpack.c.h.b16 %v281
    %v866 = vunpack.c.l.b16 %v282
    %v867 = vunpack.c.h.b16 %v282
    %v868 = vunpack.c.l.b16 %v283
    %v869 = vunpack.c.h.b16 %v283
    %v870 = vunpack.c.l.b16 %v284
    %v871 = vunpack.c.h.b16 %v284
    %v872 = vunpack.c.l.b16 %v285
    %v873 = vunpack.c.h.b16 %v285
    %v874 = vunpack.c.l.b16 %v286
    %v875 = vunpack.c.h.b16 %v286
    %v876 = vunpack.c.l.b16 %v287
    %v877 = vunpack.c.h.b16 %v287
    %v878 = vunpack.c.l.b16 %v288
    %v879 = vunpack.c.h.b16 %v288
    %v880 = vunpack.c.l.b16 %v289
    %v881 = vunpack.c.h.b16 %v289
    %v882 = vunpack.c.l.b16 %v290
    %v883 = vunpack.c.h.b16 %v290
    %v884 = vunpack.c.l.b16 %v291
    %v885 = vunpack.c.h.b16 %v291
    %v886 = vunpack.c.l.b16 %v292
    %v887 = vunpack.c.h.b16 %v292
    %v888 = vunpack.c.l.b16 %v293
    %v889 = vunpack.c.h.b16 %v293
    %v890 = vunpack.c.l.b16 %v294
    %v891 = vunpack.c.h.b16 %v294
    %v892 = vunpack.c.l.b16 %v295
    %v893 = vunpack.c.h.b16 %v295
    %v894 = vpack.c.b16 %v514, %v510
    %v895 = vpack.c.b16 %v515, %v511
    %v896 = vpack.c.b16 %v516, %v512
    %v897 = vpack.c.b16 %v517, %v513
    %v898 = vpack.c.b16 %v522, %v518
    %v899 = vpack.c.b16 %v523, %v519
    %v900 = vpack.c.b16 %v524, %v520
    %v901 = vpack.c.b16 %v525, %v521
    %v902 = vpack.c.b16 %v530, %v526
    %v903 = vpack.c.b16 %v531, %v527
    %v904 = vpack.c.b16 %v532, %v528
    %v905 = vpack.c.b16 %v533, %v529
    %v906 = vpack.c.b16 %v538, %v534
    %v907 = vpack.c.b16 %v539, %v535
    %v908 = vpack.c.b16 %v540, %v536
    %v909 = vpack.c.b16 %v541, %v537
    %v910 = vpack.c.b16 %v546, %v542
    %v911 = vpack.c.b16 %v547, %v543
    %v912 = vpack.c.b16 %v548, %v544
    %v913 = vpack.c.b16 %v549, %v545
    %v914 = vpack.c.b16 %v554, %v550
    %v915 = vpack.c.b16 %v555, %v551
    %v916 = vpack.c.b16 %v556, %v552
    %v917 = vpack.c.b16 %v557, %v553
    %v918 = vpack.c.b16 %v562, %v558
    %v919 = vpack.c.b16 %v563, %v559
    %v920 = vpack.c.b16 %v564, %v560
    %v921 = vpack.c.b16 %v565, %v561
    %v922 = vpack.c.b16 %v570, %v566
    %v923 = vpack.c.b16 %v571, %v567
    %v924 = vpack.c.b16 %v572, %v568
    %v925 = vpack.c.b16 %v573, %v569
    %v926 = vpack.c.b16 %v578, %v574
    %v927 = vpack.c.b16 %v579, %v575
    %v928 = vpack.c.b16 %v580, %v576
    %v929 = vpack.c.b16 %v581, %v577
    %v930 = vpack.c.b16 %v586, %v582
    %v931 = vpack.c.b16 %v587, %v583
    %v932 = vpack.c.b16 %v588, %v584
    %v933 = vpack.c.b16 %v589, %v585
    %v934 = vpack.c.b16 %v594, %v590
    %v935 = vpack.c.b16 %v595, %v591
    %v936 = vpack.c.b16 %v596, %v592
    %v937 = vpack.c.b16 %v597, %v593
    %v938 = vpack.c.b16 %v602, %v598
    %v939 = vpack.c.b16 %v603, %v599
    %v940 = vpack.c.b16 %v604, %v600
    %v941 = vpack.c.b16 %v605, %v601
    %v942 = vpack.c.b16 %v610, %v606
    %v943 = vpack.c.b16 %v611, %v607
    %v944 = vpack.c.b16 %v612, %v608
    %v945 = vpack.c.b16 %v613, %v609
    %v946 = vpack.c.b16 %v618, %v614
    %v947 = vpack.c.b16 %v619, %v615
    %v948 = vpack.c.b16 %v620, %v616
    %v949 = vpack.c.b16 %v621, %v617
    %v950 = vpack.c.b16 %v626, %v622
    %v951 = vpack.c.b16 %v627, %v623
    %v952 = vpack.c.b16 %v628, %v624
    %v953 = vpack.c.b16 %v629, %v625
    %v954 = vpack.c.b16 %v634, %v630
    %v955 = vpack.c.b16 %v635, %v631
    %v956 = vpack.c.b16 %v636, %v632
    %v957 = vpack.c.b16 %v637, %v633
    %v958 = vpack.c.b16 %v642, %v638
    %v959 = vpack.c.b16 %v643, %v639
    %v960 = vpack.c.b16 %v644, %v640
    %v961 = vpack.c.b16 %v645, %v641
    %v962 = vpack.c.b16 %v650, %v646
    %v963 = vpack.c.b16 %v651, %v647
    %v964 = vpack.c.b16 %v652, %v648
    %v965 = vpack.c.b16 %v653, %v649
    %v966 = vpack.c.b16 %v658, %v654
    %v967 = vpack.c.b16 %v659, %v655
    %v968 = vpack.c.b16 %v660, %v656
    %v969 = vpack.c.b16 %v661, %v657
    %v970 = vpack.c.b16 %v666, %v662
    %v971 = vpack.c.b16 %v667, %v663
    %v972 = vpack.c.b16 %v668, %v664
    %v973 = vpack.c.b16 %v669, %v665
    %v974 = vpack.c.b16 %v674, %v670
    %v975 = vpack.c.b16 %v675, %v671
    %v976 = vpack.c.b16 %v676, %v672
    %v977 = vpack.c.b16 %v677, %v673
    %v978 = vpack.c.b16 %v682, %v678
    %v979 = vpack.c.b16 %v683, %v679
    %v980 = vpack.c.b16 %v684, %v680
    %v981 = vpack.c.b16 %v685, %v681
    %v982 = vpack.c.b16 %v690, %v686
    %v983 = vpack.c.b16 %v691, %v687
    %v984 = vpack.c.b16 %v692, %v688
    %v985 = vpack.c.b16 %v693, %v689
    %v986 = vpack.c.b16 %v698, %v694
    %v987 = vpack.c.b16 %v699, %v695
    %v988 = vpack.c.b16 %v700, %v696
    %v989 = vpack.c.b16 %v701, %v697
    %v990 = vpack.c.b16 %v706, %v702
    %v991 = vpack.c.b16 %v707, %v703
    %v992 = vpack.c.b16 %v708, %v704
    %v993 = vpack.c.b16 %v709, %v705
    %v994 = vpack.c.b16 %v714, %v710
    %v995 = vpack.c.b16 %v715, %v711
    %v996 = vpack.c.b16 %v716, %v712
    %v997 = vpack.c.b16 %v717, %v713
    %v998 = vpack.c.b16 %v722, %v718
    %v999 = vpack.c.b16 %v723, %v719
    %v1000 = vpack.c.b16 %v724, %v720
    %v1001 = vpack.c.b16 %v725, %v721
    %v1002 = vpack.c.b16 %v730, %v726
    %v1003 = vpack.c.b16 %v731, %v727
    %v1004 = vpack.c.b16 %v732, %v728
    %v1005 = vpack.c.b16 %v733, %v729
    %v1006 = vpack.c.b16 %v738, %v734
    %v1007 = vpack.c.b16 %v739, %v735
    %v1008 = vpack.c.b16 %v740, %v736
    %v1009 = vpack.c.b16 %v741, %v737
    %v1010 = vpack.c.b16 %v746, %v742
    %v1011 = vpack.c.b16 %v747, %v743
    %v1012 = vpack.c.b16 %v748, %v744
    %v1013 = vpack.c.b16 %v749, %v745
    %v1014 = vpack.c.b16 %v754, %v750
    %v1015 = vpack.c.b16 %v755, %v751
    %v1016 = vpack.c.b16 %v756, %v752
    %v1017 = vpack.c.b16 %v757, %v753
    %v1018 = vpack.c.b16 %v762, %v758
    %v1019 = vpack.c.b16 %v763, %v759
    %v1020 = vpack.c.b16 %v764, %v760
    %v1021 = vpack.c.b16 %v765, %v761
    %v1022 = vpack.c.b16 %v770, %v766
    %v1023 = vpack.c.b16 %v771, %v767
    %v1024 = vpack.c.b16 %v772, %v768
    %v1025 = vpack.c.b16 %v773, %v769
    %v1026 = vpack.c.b16 %v778, %v774
    %v1027 = vpack.c.b16 %v779, %v775
    %v1028 = vpack.c.b16 %v780, %v776
    %v1029 = vpack.c.b16 %v781, %v777
    %v1030 = vpack.c.b16 %v786, %v782
    %v1031 = vpack.c.b16 %v787, %v783
    %v1032 = vpack.c.b16 %v788, %v784
    %v1033 = vpack.c.b16 %v789, %v785
    %v1034 = vpack.c.b16 %v794, %v790
    %v1035 = vpack.c.b16 %v795, %v791
    %v1036 = vpack.c.b16 %v796, %v792
    %v1037 = vpack.c.b16 %v797, %v793
    %v1038 = vpack.c.b16 %v802, %v798
    %v1039 = vpack.c.b16 %v803, %v799
    %v1040 = vpack.c.b16 %v804, %v800
    %v1041 = vpack.c.b16 %v805, %v801
    %v1042 = vpack.c.b16 %v810, %v806
    %v1043 = vpack.c.b16 %v811, %v807
    %v1044 = vpack.c.b16 %v812, %v808
    %v1045 = vpack.c.b16 %v813, %v809
    %v1046 = vpack.c.b16 %v818, %v814
    %v1047 = vpack.c.b16 %v819, %v815
    %v1048 = vpack.c.b16 %v820, %v816
    %v1049 = vpack.c.b16 %v821, %v817
    %v1050 = vpack.c.b16 %v826, %v822
    %v1051 = vpack.c.b16 %v827, %v823
    %v1052 = vpack.c.b16 %v828, %v824
    %v1053 = vpack.c.b16 %v829, %v825
    %v1054 = vpack.c.b16 %v834, %v830
    %v1055 = vpack.c.b16 %v835, %v831
    %v1056 = vpack.c.b16 %v836, %v832
    %v1057 = vpack.c.b16 %v837, %v833
    %v1058 = vpack.c.b16 %v842, %v838
    %v1059 = vpack.c.b16 %v843, %v839
    %v1060 = vpack.c.b16 %v844, %v840
    %v1061 = vpack.c.b16 %v845, %v841
    %v1062 = vpack.c.b16 %v850, %v846
    %v1063 = vpack.c.b16 %v851, %v847
    %v1064 = vpack.c.b16 %v852, %v848
    %v1065 = vpack.c.b16 %v853, %v849
    %v1066 = vpack.c.b16 %v858, %v854
    %v1067 = vpack.c.b16 %v859, %v855
    %v1068 = vpack.c.b16 %v860, %v856
    %v1069 = vpack.c.b16 %v861, %v857
    %v1070 = vpack.c.b16 %v866, %v862
    %v1071 = vpack.c.b16 %v867, %v863
    %v1072 = vpack.c.b16 %v868, %v864
    %v1073 = vpack.c.b16 %v869, %v865
    %v1074 = vpack.c.b16 %v874, %v870
    %v1075 = vpack.c.b16 %v875, %v871
    %v1076 = vpack.c.b16 %v876, %v872
    %v1077 = vpack.c.b16 %v877, %v873
    %v1078 = vpack.c.b16 %v882, %v878
    %v1079 = vpack.c.b16 %v883, %v879
    %v1080 = vpack.c.b16 %v884, %v880
    %v1081 = vpack.c.b16 %v885, %v881
    %v1082 = vpack.c.b16 %v890, %v886
    %v1083 = vpack.c.b16 %v891, %v887
    %v1084 = vpack.c.b16 %v892, %v888
    %v1085 = vpack.c.b16 %v893, %v889
    %1278 = vmatprep.subr.bf16.mxu0 %v923
    %1279 = vmatpush1.bf16.msra.mxu0 %v922
    %1280 = vmatprep.subr.bf16.mxu0 %v919
    %1281 = vmatpush1.bf16.msra.mxu0 %v918
    %1282 = vmatprep.subr.bf16.mxu0 %v915
    %1283 = vmatpush1.bf16.msra.mxu0 %v914
    %1284 = vmatprep.subr.bf16.mxu0 %v911
    %1285 = vmatpush1.bf16.msra.mxu0 %v910
    %1286 = vmatprep.subr.bf16.mxu0 %v907
    %1287 = vmatpush1.bf16.msra.mxu0 %v906
    %1288 = vmatprep.subr.bf16.mxu0 %v903
    %1289 = vmatpush1.bf16.msra.mxu0 %v902
    %1290 = vmatprep.subr.bf16.mxu0 %v899
    %1291 = vmatpush1.bf16.msra.mxu0 %v898
    %1292 = vmatprep.subr.bf16.mxu0 %v895
    %1293 = vmatpush1.bf16.msra.mxu0 %v894
    %1294 = vmatprep.subr.bf16.mxu0 %v955
    %1295 = vmatpush2.bf16.msra.mxu0 %v954
    %1296 = vmatprep.subr.bf16.mxu0 %v951
    %1297 = vmatpush2.bf16.msra.mxu0 %v950
    %1298 = vmatprep.subr.bf16.mxu0 %v947
    %1299 = vmatpush2.bf16.msra.mxu0 %v946
    %1300 = vmatprep.subr.bf16.mxu0 %v943
    %1301 = vmatpush2.bf16.msra.mxu0 %v942
    %1302 = vmatprep.subr.bf16.mxu0 %v939
    %1303 = vmatpush2.bf16.msra.mxu0 %v938
    %1304 = vmatprep.subr.bf16.mxu0 %v935
    %1305 = vmatpush2.bf16.msra.mxu0 %v934
    %1306 = vmatprep.subr.bf16.mxu0 %v931
    %1307 = vmatpush2.bf16.msra.mxu0 %v930
    %1308 = vmatprep.subr.bf16.mxu0 %v927
    %1309 = vmatpush2.bf16.msra.mxu0 %v926
    %1310 = vmatprep.mubr.bf16.mxu0 %v99
    %1311 = vmatmul.mubr.bf16.gmra.mxu0 %v98
    %v1312 = vpop.f32.mrf.mxu0
    %v1313 = vadd.f32 %v301, %v1312
    %v1314 = vpop.f32.mrf.mxu0
    %v1315 = vadd.f32 %v305, %v1314
    %v1316 = vpop.f32.mrf.mxu0
    %v1317 = vpop.f32.mrf.mxu0
    %1318 = vdwg.mxu0
    %1319 = vmatprep.subr.bf16.mxu0 %v987
    %1320 = vmatpush1.bf16.msra.mxu0 %v986
    %1321 = vmatprep.subr.bf16.mxu0 %v983
    %1322 = vmatpush1.bf16.msra.mxu0 %v982
    %1323 = vmatprep.subr.bf16.mxu0 %v979
    %1324 = vmatpush1.bf16.msra.mxu0 %v978
    %1325 = vmatprep.subr.bf16.mxu0 %v975
    %1326 = vmatpush1.bf16.msra.mxu0 %v974
    %1327 = vmatprep.subr.bf16.mxu0 %v971
    %1328 = vmatpush1.bf16.msra.mxu0 %v970
    %1329 = vmatprep.subr.bf16.mxu0 %v967
    %1330 = vmatpush1.bf16.msra.mxu0 %v966
    %1331 = vmatprep.subr.bf16.mxu0 %v963
    %1332 = vmatpush1.bf16.msra.mxu0 %v962
    %1333 = vmatprep.subr.bf16.mxu0 %v959
    %1334 = vmatpush1.bf16.msra.mxu0 %v958
    %1335 = vmatprep.subr.bf16.mxu0 %v1019
    %1336 = vmatpush2.bf16.msra.mxu0 %v1018
    %1337 = vmatprep.subr.bf16.mxu0 %v1015
    %1338 = vmatpush2.bf16.msra.mxu0 %v1014
    %1339 = vmatprep.subr.bf16.mxu0 %v1011
    %1340 = vmatpush2.bf16.msra.mxu0 %v1010
    %1341 = vmatprep.subr.bf16.mxu0 %v1007
    %1342 = vmatpush2.bf16.msra.mxu0 %v1006
    %1343 = vmatprep.subr.bf16.mxu0 %v1003
    %1344 = vmatpush2.bf16.msra.mxu0 %v1002
    %1345 = vmatprep.subr.bf16.mxu0 %v999
    %1346 = vmatpush2.bf16.msra.mxu0 %v998
    %1347 = vmatprep.subr.bf16.mxu0 %v995
    %1348 = vmatpush2.bf16.msra.mxu0 %v994
    %1349 = vmatprep.subr.bf16.mxu0 %v991
    %1350 = vmatpush2.bf16.msra.mxu0 %v990
    %1351 = vmatprep.mubr.bf16.mxu0 %v101
    %1352 = vmatmul.mubr.bf16.gmra.mxu0 %v100
    %v1353 = vpop.f32.mrf.mxu0
    %v1354 = vadd.f32 %v1313, %v1353
    %v1355 = vpop.f32.mrf.mxu0
    %v1356 = vadd.f32 %v1315, %v1355
    %v1357 = vpop.f32.mrf.mxu0
    %v1358 = vpop.f32.mrf.mxu0
    %1359 = vdwg.mxu0
    %1360 = vmatprep.subr.bf16.mxu0 %v1051
    %1361 = vmatpush1.bf16.msra.mxu0 %v1050
    %1362 = vmatprep.subr.bf16.mxu0 %v1047
    %1363 = vmatpush1.bf16.msra.mxu0 %v1046
    %1364 = vmatprep.subr.bf16.mxu0 %v1043
    %1365 = vmatpush1.bf16.msra.mxu0 %v1042
    %1366 = vmatprep.subr.bf16.mxu0 %v1039
    %1367 = vmatpush1.bf16.msra.mxu0 %v1038
    %1368 = vmatprep.subr.bf16.mxu0 %v1035
    %1369 = vmatpush1.bf16.msra.mxu0 %v1034
    %1370 = vmatprep.subr.bf16.mxu0 %v1031
    %1371 = vmatpush1.bf16.msra.mxu0 %v1030
    %1372 = vmatprep.subr.bf16.mxu0 %v1027
    %1373 = vmatpush1.bf16.msra.mxu0 %v1026
    %1374 = vmatprep.subr.bf16.mxu0 %v1023
    %1375 = vmatpush1.bf16.msra.mxu0 %v1022
    %1376 = vmatprep.subr.bf16.mxu0 %v1083
    %1377 = vmatpush2.bf16.msra.mxu0 %v1082
    %1378 = vmatprep.subr.bf16.mxu0 %v1079
    %1379 = vmatpush2.bf16.msra.mxu0 %v1078
    %1380 = vmatprep.subr.bf16.mxu0 %v1075
    %1381 = vmatpush2.bf16.msra.mxu0 %v1074
    %1382 = vmatprep.subr.bf16.mxu0 %v1071
    %1383 = vmatpush2.bf16.msra.mxu0 %v1070
    %1384 = vmatprep.subr.bf16.mxu0 %v1067
    %1385 = vmatpush2.bf16.msra.mxu0 %v1066
    %1386 = vmatprep.subr.bf16.mxu0 %v1063
    %1387 = vmatpush2.bf16.msra.mxu0 %v1062
    %1388 = vmatprep.subr.bf16.mxu0 %v1059
    %1389 = vmatpush2.bf16.msra.mxu0 %v1058
    %1390 = vmatprep.subr.bf16.mxu0 %v1055
    %1391 = vmatpush2.bf16.msra.mxu0 %v1054
    %1392 = vmatprep.mubr.bf16.mxu0 %v103
    %1393 = vmatmul.mubr.bf16.gmra.mxu0 %v102
    %v1394 = vpop.f32.mrf.mxu0
    %v1395 = vadd.f32 %v1354, %v1394
    %v1396 = vpop.f32.mrf.mxu0
    %v1397 = vadd.f32 %v1356, %v1396
    %v1398 = vpop.f32.mrf.mxu0
    %v1399 = vpop.f32.mrf.mxu0
    %1400 = vdwg.mxu0
    %1401 = vmatprep.subr.bf16.mxu0 %v925
    %1402 = vmatpush1.bf16.msra.mxu0 %v924
    %1403 = vmatprep.subr.bf16.mxu0 %v921
    %1404 = vmatpush1.bf16.msra.mxu0 %v920
    %1405 = vmatprep.subr.bf16.mxu0 %v917
    %1406 = vmatpush1.bf16.msra.mxu0 %v916
    %1407 = vmatprep.subr.bf16.mxu0 %v913
    %1408 = vmatpush1.bf16.msra.mxu0 %v912
    %1409 = vmatprep.subr.bf16.mxu0 %v909
    %1410 = vmatpush1.bf16.msra.mxu0 %v908
    %1411 = vmatprep.subr.bf16.mxu0 %v905
    %1412 = vmatpush1.bf16.msra.mxu0 %v904
    %1413 = vmatprep.subr.bf16.mxu0 %v901
    %1414 = vmatpush1.bf16.msra.mxu0 %v900
    %1415 = vmatprep.subr.bf16.mxu0 %v897
    %1416 = vmatpush1.bf16.msra.mxu0 %v896
    %1417 = vmatprep.subr.bf16.mxu0 %v957
    %1418 = vmatpush2.bf16.msra.mxu0 %v956
    %1419 = vmatprep.subr.bf16.mxu0 %v953
    %1420 = vmatpush2.bf16.msra.mxu0 %v952
    %1421 = vmatprep.subr.bf16.mxu0 %v949
    %1422 = vmatpush2.bf16.msra.mxu0 %v948
    %1423 = vmatprep.subr.bf16.mxu0 %v945
    %1424 = vmatpush2.bf16.msra.mxu0 %v944
    %1425 = vmatprep.subr.bf16.mxu0 %v941
    %1426 = vmatpush2.bf16.msra.mxu0 %v940
    %1427 = vmatprep.subr.bf16.mxu0 %v937
    %1428 = vmatpush2.bf16.msra.mxu0 %v936
    %1429 = vmatprep.subr.bf16.mxu0 %v933
    %1430 = vmatpush2.bf16.msra.mxu0 %v932
    %1431 = vmatprep.subr.bf16.mxu0 %v929
    %1432 = vmatpush2.bf16.msra.mxu0 %v928
    %1433 = vmatprep.mubr.bf16.mxu0 %v99
    %1434 = vmatmul.mubr.bf16.gmra.mxu0 %v98
    %v1435 = vpop.f32.mrf.mxu0
    %v1436 = vadd.f32 %v309, %v1435
    %v1437 = vpop.f32.mrf.mxu0
    %v1438 = vadd.f32 %v313, %v1437
    %v1439 = vpop.f32.mrf.mxu0
    %v1440 = vpop.f32.mrf.mxu0
    %1441 = vdwg.mxu0
    %1442 = vmatprep.subr.bf16.mxu0 %v989
    %1443 = vmatpush1.bf16.msra.mxu0 %v988
    %1444 = vmatprep.subr.bf16.mxu0 %v985
    %1445 = vmatpush1.bf16.msra.mxu0 %v984
    %1446 = vmatprep.subr.bf16.mxu0 %v981
    %1447 = vmatpush1.bf16.msra.mxu0 %v980
    %1448 = vmatprep.subr.bf16.mxu0 %v977
    %1449 = vmatpush1.bf16.msra.mxu0 %v976
    %1450 = vmatprep.subr.bf16.mxu0 %v973
    %1451 = vmatpush1.bf16.msra.mxu0 %v972
    %1452 = vmatprep.subr.bf16.mxu0 %v969
    %1453 = vmatpush1.bf16.msra.mxu0 %v968
    %1454 = vmatprep.subr.bf16.mxu0 %v965
    %1455 = vmatpush1.bf16.msra.mxu0 %v964
    %1456 = vmatprep.subr.bf16.mxu0 %v961
    %1457 = vmatpush1.bf16.msra.mxu0 %v960
    %1458 = vmatprep.subr.bf16.mxu0 %v1021
    %1459 = vmatpush2.bf16.msra.mxu0 %v1020
    %1460 = vmatprep.subr.bf16.mxu0 %v1017
    %1461 = vmatpush2.bf16.msra.mxu0 %v1016
    %1462 = vmatprep.subr.bf16.mxu0 %v1013
    %1463 = vmatpush2.bf16.msra.mxu0 %v1012
    %1464 = vmatprep.subr.bf16.mxu0 %v1009
    %1465 = vmatpush2.bf16.msra.mxu0 %v1008
    %1466 = vmatprep.subr.bf16.mxu0 %v1005
    %1467 = vmatpush2.bf16.msra.mxu0 %v1004
    %1468 = vmatprep.subr.bf16.mxu0 %v1001
    %1469 = vmatpush2.bf16.msra.mxu0 %v1000
    %1470 = vmatprep.subr.bf16.mxu0 %v997
    %1471 = vmatpush2.bf16.msra.mxu0 %v996
    %1472 = vmatprep.subr.bf16.mxu0 %v993
    %1473 = vmatpush2.bf16.msra.mxu0 %v992
    %1474 = vmatprep.mubr.bf16.mxu0 %v101
    %1475 = vmatmul.mubr.bf16.gmra.mxu0 %v100
    %v1476 = vpop.f32.mrf.mxu0
    %v1477 = vadd.f32 %v1436, %v1476
    %v1478 = vpop.f32.mrf.mxu0
    %v1479 = vadd.f32 %v1438, %v1478
    %v1480 = vpop.f32.mrf.mxu0
    %v1481 = vpop.f32.mrf.mxu0
    %1482 = vdwg.mxu0
    %1483 = vmatprep.subr.bf16.mxu0 %v1053
    %1484 = vmatpush1.bf16.msra.mxu0 %v1052
    %1485 = vmatprep.subr.bf16.mxu0 %v1049
    %1486 = vmatpush1.bf16.msra.mxu0 %v1048
    %1487 = vmatprep.subr.bf16.mxu0 %v1045
    %1488 = vmatpush1.bf16.msra.mxu0 %v1044
    %1489 = vmatprep.subr.bf16.mxu0 %v1041
    %1490 = vmatpush1.bf16.msra.mxu0 %v1040
    %1491 = vmatprep.subr.bf16.mxu0 %v1037
    %1492 = vmatpush1.bf16.msra.mxu0 %v1036
    %1493 = vmatprep.subr.bf16.mxu0 %v1033
    %1494 = vmatpush1.bf16.msra.mxu0 %v1032
    %1495 = vmatprep.subr.bf16.mxu0 %v1029
    %1496 = vmatpush1.bf16.msra.mxu0 %v1028
    %1497 = vmatprep.subr.bf16.mxu0 %v1025
    %1498 = vmatpush1.bf16.msra.mxu0 %v1024
    %1499 = vmatprep.subr.bf16.mxu0 %v1085
    %1500 = vmatpush2.bf16.msra.mxu0 %v1084
    %1501 = vmatprep.subr.bf16.mxu0 %v1081
    %1502 = vmatpush2.bf16.msra.mxu0 %v1080
    %1503 = vmatprep.subr.bf16.mxu0 %v1077
    %1504 = vmatpush2.bf16.msra.mxu0 %v1076
    %1505 = vmatprep.subr.bf16.mxu0 %v1073
    %1506 = vmatpush2.bf16.msra.mxu0 %v1072
    %1507 = vmatprep.subr.bf16.mxu0 %v1069
    %1508 = vmatpush2.bf16.msra.mxu0 %v1068
    %1509 = vmatprep.subr.bf16.mxu0 %v1065
    %1510 = vmatpush2.bf16.msra.mxu0 %v1064
    %1511 = vmatprep.subr.bf16.mxu0 %v1061
    %1512 = vmatpush2.bf16.msra.mxu0 %v1060
    %1513 = vmatprep.subr.bf16.mxu0 %v1057
    %1514 = vmatpush2.bf16.msra.mxu0 %v1056
    %1515 = vmatprep.mubr.bf16.mxu0 %v103
    %1516 = vmatmul.mubr.bf16.gmra.mxu0 %v102
    %v1517 = vpop.f32.mrf.mxu0
    %v1518 = vadd.f32 %v1477, %v1517
    %v1519 = vpop.f32.mrf.mxu0
    %v1520 = vadd.f32 %v1479, %v1519
    %v1521 = vpop.f32.mrf.mxu0
    %v1522 = vpop.f32.mrf.mxu0
    %1523 = vdwg.mxu0
    %v1524 = vmax.f32 %v1395, 0.0
    %v1525 = vmax.f32 %v1397, 0.0
    %v1526 = vmax.f32 %v1518, 0.0
    %v1527 = vmax.f32 %v1520, 0.0
    %v1528 = vpack.c.bf16 %v1524, %v1524
    %v1529 = vpack.c.bf16 %v1525, %v1525
    %v1530 = vpack.c.bf16 %v1526, %v1526
    %v1531 = vpack.c.bf16 %v1527, %v1527
    %v1532 = vld [vmem:[#allocation8] sm:$0xff]
    %v1533 = vld [vmem:[#allocation8 + $0x8] sm:$0xff]
    %v1534 = vld [vmem:[#allocation8 + $0x10] sm:$0xff]
    %v1535 = vld [vmem:[#allocation8 + $0x18] sm:$0xff]
    %v1536 = vld [vmem:[#allocation8 + $0x20] sm:$0xff]
    %v1537 = vld [vmem:[#allocation8 + $0x28] sm:$0xff]
    %v1538 = vld [vmem:[#allocation8 + $0x30] sm:$0xff]
    %v1539 = vld [vmem:[#allocation8 + $0x38] sm:$0xff]
    %v1540 = vld [vmem:[#allocation8 + $0x40] sm:$0xff]
    %v1541 = vld [vmem:[#allocation8 + $0x48] sm:$0xff]
    %v1542 = vld [vmem:[#allocation8 + $0x50] sm:$0xff]
    %v1543 = vld [vmem:[#allocation8 + $0x58] sm:$0xff]
    %v1544 = vld [vmem:[#allocation8 + $0x60] sm:$0xff]
    %v1545 = vld [vmem:[#allocation8 + $0x68] sm:$0xff]
    %v1546 = vld [vmem:[#allocation8 + $0x70] sm:$0xff]
    %v1547 = vld [vmem:[#allocation8 + $0x78] sm:$0xff]
    %v1548 = vld [vmem:[#allocation8 + $0x80] sm:$0xff]
    %v1549 = vld [vmem:[#allocation8 + $0x88] sm:$0xff]
    %v1550 = vld [vmem:[#allocation8 + $0x90] sm:$0xff]
    %v1551 = vld [vmem:[#allocation8 + $0x98] sm:$0xff]
    %v1552 = vld [vmem:[#allocation8 + $0xa0] sm:$0xff]
    %v1553 = vld [vmem:[#allocation8 + $0xa8] sm:$0xff]
    %v1554 = vld [vmem:[#allocation8 + $0xb0] sm:$0xff]
    %v1555 = vld [vmem:[#allocation8 + $0xb8] sm:$0xff]
    %v1556 = vld [vmem:[#allocation8 + $0xc0] sm:$0xff]
    %v1557 = vld [vmem:[#allocation8 + $0xc8] sm:$0xff]
    %v1558 = vld [vmem:[#allocation8 + $0xd0] sm:$0xff]
    %v1559 = vld [vmem:[#allocation8 + $0xd8] sm:$0xff]
    %v1560 = vld [vmem:[#allocation8 + $0xe0] sm:$0xff]
    %v1561 = vld [vmem:[#allocation8 + $0xe8] sm:$0xff]
    %v1562 = vld [vmem:[#allocation8 + $0xf0] sm:$0xff]
    %v1563 = vld [vmem:[#allocation8 + $0xf8] sm:$0xff]
    %v1564 = vld [vmem:[#allocation8 + $0x100] sm:$0xff]
    %v1565 = vld [vmem:[#allocation8 + $0x108] sm:$0xff]
    %v1566 = vld [vmem:[#allocation8 + $0x110] sm:$0xff]
    %v1567 = vld [vmem:[#allocation8 + $0x118] sm:$0xff]
    %v1568 = vld [vmem:[#allocation8 + $0x120] sm:$0xff]
    %v1569 = vld [vmem:[#allocation8 + $0x128] sm:$0xff]
    %v1570 = vld [vmem:[#allocation8 + $0x130] sm:$0xff]
    %v1571 = vld [vmem:[#allocation8 + $0x138] sm:$0xff]
    %v1572 = vld [vmem:[#allocation8 + $0x140] sm:$0xff]
    %v1573 = vld [vmem:[#allocation8 + $0x148] sm:$0xff]
    %v1574 = vld [vmem:[#allocation8 + $0x150] sm:$0xff]
    %v1575 = vld [vmem:[#allocation8 + $0x158] sm:$0xff]
    %v1576 = vld [vmem:[#allocation8 + $0x160] sm:$0xff]
    %v1577 = vld [vmem:[#allocation8 + $0x168] sm:$0xff]
    %v1578 = vld [vmem:[#allocation8 + $0x170] sm:$0xff]
    %v1579 = vld [vmem:[#allocation8 + $0x178] sm:$0xff]
    %v1580 = vld [vmem:[#allocation8 + $0x180] sm:$0xff]
    %v1581 = vld [vmem:[#allocation8 + $0x188] sm:$0xff]
    %v1582 = vld [vmem:[#allocation8 + $0x190] sm:$0xff]
    %v1583 = vld [vmem:[#allocation8 + $0x198] sm:$0xff]
    %v1584 = vld [vmem:[#allocation8 + $0x1a0] sm:$0xff]
    %v1585 = vld [vmem:[#allocation8 + $0x1a8] sm:$0xff]
    %v1586 = vld [vmem:[#allocation8 + $0x1b0] sm:$0xff]
    %v1587 = vld [vmem:[#allocation8 + $0x1b8] sm:$0xff]
    %v1588 = vld [vmem:[#allocation8 + $0x1c0] sm:$0xff]
    %v1589 = vld [vmem:[#allocation8 + $0x1c8] sm:$0xff]
    %v1590 = vld [vmem:[#allocation8 + $0x1d0] sm:$0xff]
    %v1591 = vld [vmem:[#allocation8 + $0x1d8] sm:$0xff]
    %v1592 = vld [vmem:[#allocation8 + $0x1e0] sm:$0xff]
    %v1593 = vld [vmem:[#allocation8 + $0x1e8] sm:$0xff]
    %v1594 = vld [vmem:[#allocation8 + $0x1f0] sm:$0xff]
    %v1595 = vld [vmem:[#allocation8 + $0x1f8] sm:$0xff]
    %v1596 = vld [vmem:[%s4] sm:$0x3]
    %v1598 = vlaneseq
    %v1599 = vshrl.u32 %v1598, 7
    %v1600 = vsub.s32 0, %v1599
    %v1601 = vrot.slane %v1596, %v1600
    %v1602 = vlaneseq
    %v1603 = vshrl.u32 %v1602, 7
    %v1604 = vsub.s32 1, %v1603
    %v1605 = vrot.slane %v1596, %v1604
    %v1672 = vunpack.c.l.b16 %v1532
    %v1673 = vunpack.c.h.b16 %v1532
    %v1674 = vunpack.c.l.b16 %v1533
    %v1675 = vunpack.c.h.b16 %v1533
    %v1676 = vunpack.c.l.b16 %v1534
    %v1677 = vunpack.c.h.b16 %v1534
    %v1678 = vunpack.c.l.b16 %v1535
    %v1679 = vunpack.c.h.b16 %v1535
    %v1680 = vunpack.c.l.b16 %v1536
    %v1681 = vunpack.c.h.b16 %v1536
    %v1682 = vunpack.c.l.b16 %v1537
    %v1683 = vunpack.c.h.b16 %v1537
    %v1684 = vunpack.c.l.b16 %v1538
    %v1685 = vunpack.c.h.b16 %v1538
    %v1686 = vunpack.c.l.b16 %v1539
    %v1687 = vunpack.c.h.b16 %v1539
    %v1688 = vunpack.c.l.b16 %v1540
    %v1689 = vunpack.c.h.b16 %v1540
    %v1690 = vunpack.c.l.b16 %v1541
    %v1691 = vunpack.c.h.b16 %v1541
    %v1692 = vunpack.c.l.b16 %v1542
    %v1693 = vunpack.c.h.b16 %v1542
    %v1694 = vunpack.c.l.b16 %v1543
    %v1695 = vunpack.c.h.b16 %v1543
    %v1696 = vunpack.c.l.b16 %v1544
    %v1697 = vunpack.c.h.b16 %v1544
    %v1698 = vunpack.c.l.b16 %v1545
    %v1699 = vunpack.c.h.b16 %v1545
    %v1700 = vunpack.c.l.b16 %v1546
    %v1701 = vunpack.c.h.b16 %v1546
    %v1702 = vunpack.c.l.b16 %v1547
    %v1703 = vunpack.c.h.b16 %v1547
    %v1704 = vunpack.c.l.b16 %v1548
    %v1705 = vunpack.c.h.b16 %v1548
    %v1706 = vunpack.c.l.b16 %v1549
    %v1707 = vunpack.c.h.b16 %v1549
    %v1708 = vunpack.c.l.b16 %v1550
    %v1709 = vunpack.c.h.b16 %v1550
    %v1710 = vunpack.c.l.b16 %v1551
    %v1711 = vunpack.c.h.b16 %v1551
    %v1712 = vunpack.c.l.b16 %v1552
    %v1713 = vunpack.c.h.b16 %v1552
    %v1714 = vunpack.c.l.b16 %v1553
    %v1715 = vunpack.c.h.b16 %v1553
    %v1716 = vunpack.c.l.b16 %v1554
    %v1717 = vunpack.c.h.b16 %v1554
    %v1718 = vunpack.c.l.b16 %v1555
    %v1719 = vunpack.c.h.b16 %v1555
    %v1720 = vunpack.c.l.b16 %v1556
    %v1721 = vunpack.c.h.b16 %v1556
    %v1722 = vunpack.c.l.b16 %v1557
    %v1723 = vunpack.c.h.b16 %v1557
    %v1724 = vunpack.c.l.b16 %v1558
    %v1725 = vunpack.c.h.b16 %v1558
    %v1726 = vunpack.c.l.b16 %v1559
    %v1727 = vunpack.c.h.b16 %v1559
    %v1728 = vunpack.c.l.b16 %v1560
    %v1729 = vunpack.c.h.b16 %v1560
    %v1730 = vunpack.c.l.b16 %v1561
    %v1731 = vunpack.c.h.b16 %v1561
    %v1732 = vunpack.c.l.b16 %v1562
    %v1733 = vunpack.c.h.b16 %v1562
    %v1734 = vunpack.c.l.b16 %v1563
    %v1735 = vunpack.c.h.b16 %v1563
    %v1736 = vunpack.c.l.b16 %v1564
    %v1737 = vunpack.c.h.b16 %v1564
    %v1738 = vunpack.c.l.b16 %v1565
    %v1739 = vunpack.c.h.b16 %v1565
    %v1740 = vunpack.c.l.b16 %v1566
    %v1741 = vunpack.c.h.b16 %v1566
    %v1742 = vunpack.c.l.b16 %v1567
    %v1743 = vunpack.c.h.b16 %v1567
    %v1744 = vunpack.c.l.b16 %v1568
    %v1745 = vunpack.c.h.b16 %v1568
    %v1746 = vunpack.c.l.b16 %v1569
    %v1747 = vunpack.c.h.b16 %v1569
    %v1748 = vunpack.c.l.b16 %v1570
    %v1749 = vunpack.c.h.b16 %v1570
    %v1750 = vunpack.c.l.b16 %v1571
    %v1751 = vunpack.c.h.b16 %v1571
    %v1752 = vunpack.c.l.b16 %v1572
    %v1753 = vunpack.c.h.b16 %v1572
    %v1754 = vunpack.c.l.b16 %v1573
    %v1755 = vunpack.c.h.b16 %v1573
    %v1756 = vunpack.c.l.b16 %v1574
    %v1757 = vunpack.c.h.b16 %v1574
    %v1758 = vunpack.c.l.b16 %v1575
    %v1759 = vunpack.c.h.b16 %v1575
    %v1760 = vunpack.c.l.b16 %v1576
    %v1761 = vunpack.c.h.b16 %v1576
    %v1762 = vunpack.c.l.b16 %v1577
    %v1763 = vunpack.c.h.b16 %v1577
    %v1764 = vunpack.c.l.b16 %v1578
    %v1765 = vunpack.c.h.b16 %v1578
    %v1766 = vunpack.c.l.b16 %v1579
    %v1767 = vunpack.c.h.b16 %v1579
    %v1768 = vunpack.c.l.b16 %v1580
    %v1769 = vunpack.c.h.b16 %v1580
    %v1770 = vunpack.c.l.b16 %v1581
    %v1771 = vunpack.c.h.b16 %v1581
    %v1772 = vunpack.c.l.b16 %v1582
    %v1773 = vunpack.c.h.b16 %v1582
    %v1774 = vunpack.c.l.b16 %v1583
    %v1775 = vunpack.c.h.b16 %v1583
    %v1776 = vunpack.c.l.b16 %v1584
    %v1777 = vunpack.c.h.b16 %v1584
    %v1778 = vunpack.c.l.b16 %v1585
    %v1779 = vunpack.c.h.b16 %v1585
    %v1780 = vunpack.c.l.b16 %v1586
    %v1781 = vunpack.c.h.b16 %v1586
    %v1782 = vunpack.c.l.b16 %v1587
    %v1783 = vunpack.c.h.b16 %v1587
    %v1784 = vunpack.c.l.b16 %v1588
    %v1785 = vunpack.c.h.b16 %v1588
    %v1786 = vunpack.c.l.b16 %v1589
    %v1787 = vunpack.c.h.b16 %v1589
    %v1788 = vunpack.c.l.b16 %v1590
    %v1789 = vunpack.c.h.b16 %v1590
    %v1790 = vunpack.c.l.b16 %v1591
    %v1791 = vunpack.c.h.b16 %v1591
    %v1792 = vunpack.c.l.b16 %v1592
    %v1793 = vunpack.c.h.b16 %v1592
    %v1794 = vunpack.c.l.b16 %v1593
    %v1795 = vunpack.c.h.b16 %v1593
    %v1796 = vunpack.c.l.b16 %v1594
    %v1797 = vunpack.c.h.b16 %v1594
    %v1798 = vunpack.c.l.b16 %v1595
    %v1799 = vunpack.c.h.b16 %v1595
    %v1800 = vpack.c.b16 %v1674, %v1672
    %v1801 = vpack.c.b16 %v1675, %v1673
    %v1802 = vpack.c.b16 %v1678, %v1676
    %v1803 = vpack.c.b16 %v1679, %v1677
    %v1804 = vpack.c.b16 %v1682, %v1680
    %v1805 = vpack.c.b16 %v1683, %v1681
    %v1806 = vpack.c.b16 %v1686, %v1684
    %v1807 = vpack.c.b16 %v1687, %v1685
    %v1808 = vpack.c.b16 %v1690, %v1688
    %v1809 = vpack.c.b16 %v1691, %v1689
    %v1810 = vpack.c.b16 %v1694, %v1692
    %v1811 = vpack.c.b16 %v1695, %v1693
    %v1812 = vpack.c.b16 %v1698, %v1696
    %v1813 = vpack.c.b16 %v1699, %v1697
    %v1814 = vpack.c.b16 %v1702, %v1700
    %v1815 = vpack.c.b16 %v1703, %v1701
    %v1816 = vpack.c.b16 %v1706, %v1704
    %v1817 = vpack.c.b16 %v1707, %v1705
    %v1818 = vpack.c.b16 %v1710, %v1708
    %v1819 = vpack.c.b16 %v1711, %v1709
    %v1820 = vpack.c.b16 %v1714, %v1712
    %v1821 = vpack.c.b16 %v1715, %v1713
    %v1822 = vpack.c.b16 %v1718, %v1716
    %v1823 = vpack.c.b16 %v1719, %v1717
    %v1824 = vpack.c.b16 %v1722, %v1720
    %v1825 = vpack.c.b16 %v1723, %v1721
    %v1826 = vpack.c.b16 %v1726, %v1724
    %v1827 = vpack.c.b16 %v1727, %v1725
    %v1828 = vpack.c.b16 %v1730, %v1728
    %v1829 = vpack.c.b16 %v1731, %v1729
    %v1830 = vpack.c.b16 %v1734, %v1732
    %v1831 = vpack.c.b16 %v1735, %v1733
    %v1832 = vpack.c.b16 %v1738, %v1736
    %v1833 = vpack.c.b16 %v1739, %v1737
    %v1834 = vpack.c.b16 %v1742, %v1740
    %v1835 = vpack.c.b16 %v1743, %v1741
    %v1836 = vpack.c.b16 %v1746, %v1744
    %v1837 = vpack.c.b16 %v1747, %v1745
    %v1838 = vpack.c.b16 %v1750, %v1748
    %v1839 = vpack.c.b16 %v1751, %v1749
    %v1840 = vpack.c.b16 %v1754, %v1752
    %v1841 = vpack.c.b16 %v1755, %v1753
    %v1842 = vpack.c.b16 %v1758, %v1756
    %v1843 = vpack.c.b16 %v1759, %v1757
    %v1844 = vpack.c.b16 %v1762, %v1760
    %v1845 = vpack.c.b16 %v1763, %v1761
    %v1846 = vpack.c.b16 %v1766, %v1764
    %v1847 = vpack.c.b16 %v1767, %v1765
    %v1848 = vpack.c.b16 %v1770, %v1768
    %v1849 = vpack.c.b16 %v1771, %v1769
    %v1850 = vpack.c.b16 %v1774, %v1772
    %v1851 = vpack.c.b16 %v1775, %v1773
    %v1852 = vpack.c.b16 %v1778, %v1776
    %v1853 = vpack.c.b16 %v1779, %v1777
    %v1854 = vpack.c.b16 %v1782, %v1780
    %v1855 = vpack.c.b16 %v1783, %v1781
    %v1856 = vpack.c.b16 %v1786, %v1784
    %v1857 = vpack.c.b16 %v1787, %v1785
    %v1858 = vpack.c.b16 %v1790, %v1788
    %v1859 = vpack.c.b16 %v1791, %v1789
    %v1860 = vpack.c.b16 %v1794, %v1792
    %v1861 = vpack.c.b16 %v1795, %v1793
    %v1862 = vpack.c.b16 %v1798, %v1796
    %v1863 = vpack.c.b16 %v1799, %v1797
    %1928 = vmatprep.subr.bf16.mxu0 %v1815
    %1929 = vmatpush1.bf16.msra.mxu0 %v1814
    %1930 = vmatprep.subr.bf16.mxu0 %v1813
    %1931 = vmatpush1.bf16.msra.mxu0 %v1812
    %1932 = vmatprep.subr.bf16.mxu0 %v1811
    %1933 = vmatpush1.bf16.msra.mxu0 %v1810
    %1934 = vmatprep.subr.bf16.mxu0 %v1809
    %1935 = vmatpush1.bf16.msra.mxu0 %v1808
    %1936 = vmatprep.subr.bf16.mxu0 %v1807
    %1937 = vmatpush1.bf16.msra.mxu0 %v1806
    %1938 = vmatprep.subr.bf16.mxu0 %v1805
    %1939 = vmatpush1.bf16.msra.mxu0 %v1804
    %1940 = vmatprep.subr.bf16.mxu0 %v1803
    %1941 = vmatpush1.bf16.msra.mxu0 %v1802
    %1942 = vmatprep.subr.bf16.mxu0 %v1801
    %1943 = vmatpush1.bf16.msra.mxu0 %v1800
    %1944 = vmatprep.subr.bf16.mxu0 %v1831
    %1945 = vmatpush2.bf16.msra.mxu0 %v1830
    %1946 = vmatprep.subr.bf16.mxu0 %v1829
    %1947 = vmatpush2.bf16.msra.mxu0 %v1828
    %1948 = vmatprep.subr.bf16.mxu0 %v1827
    %1949 = vmatpush2.bf16.msra.mxu0 %v1826
    %1950 = vmatprep.subr.bf16.mxu0 %v1825
    %1951 = vmatpush2.bf16.msra.mxu0 %v1824
    %1952 = vmatprep.subr.bf16.mxu0 %v1823
    %1953 = vmatpush2.bf16.msra.mxu0 %v1822
    %1954 = vmatprep.subr.bf16.mxu0 %v1821
    %1955 = vmatpush2.bf16.msra.mxu0 %v1820
    %1956 = vmatprep.subr.bf16.mxu0 %v1819
    %1957 = vmatpush2.bf16.msra.mxu0 %v1818
    %1958 = vmatprep.subr.bf16.mxu0 %v1817
    %1959 = vmatpush2.bf16.msra.mxu0 %v1816
    %1960 = vmatprep.mubr.bf16.mxu0 %v1529
    %1961 = vmatmul.mubr.bf16.gmra.mxu0 %v1528
    %v1962 = vpop.f32.mrf.mxu0
    %v1963 = vadd.f32 %v1601, %v1962
    %v1964 = vpop.f32.mrf.mxu0
    %v1965 = vadd.f32 %v1605, %v1964
    %v1966 = vpop.f32.mrf.mxu0
    %v1967 = vpop.f32.mrf.mxu0
    %1968 = vdwg.mxu0
    %1969 = vmatprep.subr.bf16.mxu0 %v1847
    %1970 = vmatpush1.bf16.msra.mxu0 %v1846
    %1971 = vmatprep.subr.bf16.mxu0 %v1845
    %1972 = vmatpush1.bf16.msra.mxu0 %v1844
    %1973 = vmatprep.subr.bf16.mxu0 %v1843
    %1974 = vmatpush1.bf16.msra.mxu0 %v1842
    %1975 = vmatprep.subr.bf16.mxu0 %v1841
    %1976 = vmatpush1.bf16.msra.mxu0 %v1840
    %1977 = vmatprep.subr.bf16.mxu0 %v1839
    %1978 = vmatpush1.bf16.msra.mxu0 %v1838
    %1979 = vmatprep.subr.bf16.mxu0 %v1837
    %1980 = vmatpush1.bf16.msra.mxu0 %v1836
    %1981 = vmatprep.subr.bf16.mxu0 %v1835
    %1982 = vmatpush1.bf16.msra.mxu0 %v1834
    %1983 = vmatprep.subr.bf16.mxu0 %v1833
    %1984 = vmatpush1.bf16.msra.mxu0 %v1832
    %1985 = vmatprep.subr.bf16.mxu0 %v1863
    %1986 = vmatpush2.bf16.msra.mxu0 %v1862
    %1987 = vmatprep.subr.bf16.mxu0 %v1861
    %1988 = vmatpush2.bf16.msra.mxu0 %v1860
    %1989 = vmatprep.subr.bf16.mxu0 %v1859
    %1990 = vmatpush2.bf16.msra.mxu0 %v1858
    %1991 = vmatprep.subr.bf16.mxu0 %v1857
    %1992 = vmatpush2.bf16.msra.mxu0 %v1856
    %1993 = vmatprep.subr.bf16.mxu0 %v1855
    %1994 = vmatpush2.bf16.msra.mxu0 %v1854
    %1995 = vmatprep.subr.bf16.mxu0 %v1853
    %1996 = vmatpush2.bf16.msra.mxu0 %v1852
    %1997 = vmatprep.subr.bf16.mxu0 %v1851
    %1998 = vmatpush2.bf16.msra.mxu0 %v1850
    %1999 = vmatprep.subr.bf16.mxu0 %v1849
    %2000 = vmatpush2.bf16.msra.mxu0 %v1848
    %2001 = vmatprep.mubr.bf16.mxu0 %v1531
    %2002 = vmatmul.mubr.bf16.gmra.mxu0 %v1530
    %v2003 = vpop.f32.mrf.mxu0
    %v2004 = vadd.f32 %v1963, %v2003
    %v2005 = vpop.f32.mrf.mxu0
    %v2006 = vadd.f32 %v1965, %v2005
    %v2007 = vpop.f32.mrf.mxu0
    %v2008 = vpop.f32.mrf.mxu0
    %2009 = vdwg.mxu0
    %v2010 = vmax.f32 %v2004, 0.0
    %v2011 = vmax.f32 %v2006, 0.0
    %v2012 = vpack.c.bf16 %v2010, %v2010
    %v2013 = vpack.c.bf16 %v2011, %v2011
    %v2014 = vld [vmem:[#allocation10] sm:$0xf]
    %v2015 = vld [vmem:[#allocation10 + $0x4] sm:$0xf]
    %v2016 = vld [vmem:[#allocation10 + $0x8] sm:$0xf]
    %v2017 = vld [vmem:[#allocation10 + $0xc] sm:$0xf]
    %v2018 = vld [vmem:[#allocation10 + $0x10] sm:$0xf]
    %v2019 = vld [vmem:[#allocation10 + $0x14] sm:$0xf]
    %v2020 = vld [vmem:[#allocation10 + $0x18] sm:$0xf]
    %v2021 = vld [vmem:[#allocation10 + $0x1c] sm:$0xf]
    %v2022 = vld [vmem:[#allocation10 + $0x20] sm:$0xf]
    %v2023 = vld [vmem:[#allocation10 + $0x24] sm:$0xf]
    %v2024 = vld [vmem:[#allocation10 + $0x28] sm:$0xf]
    %v2025 = vld [vmem:[#allocation10 + $0x2c] sm:$0xf]
    %v2026 = vld [vmem:[#allocation10 + $0x30] sm:$0xf]
    %v2027 = vld [vmem:[#allocation10 + $0x34] sm:$0xf]
    %v2028 = vld [vmem:[#allocation10 + $0x38] sm:$0xf]
    %v2029 = vld [vmem:[#allocation10 + $0x3c] sm:$0xf]
    %v2030 = vld [vmem:[#allocation10 + $0x40] sm:$0xf]
    %v2031 = vld [vmem:[#allocation10 + $0x44] sm:$0xf]
    %v2032 = vld [vmem:[#allocation10 + $0x48] sm:$0xf]
    %v2033 = vld [vmem:[#allocation10 + $0x4c] sm:$0xf]
    %v2034 = vld [vmem:[#allocation10 + $0x50] sm:$0xf]
    %v2035 = vld [vmem:[#allocation10 + $0x54] sm:$0xf]
    %v2036 = vld [vmem:[#allocation10 + $0x58] sm:$0xf]
    %v2037 = vld [vmem:[#allocation10 + $0x5c] sm:$0xf]
    %v2038 = vld [vmem:[#allocation10 + $0x60] sm:$0xf]
    %v2039 = vld [vmem:[#allocation10 + $0x64] sm:$0xf]
    %v2040 = vld [vmem:[#allocation10 + $0x68] sm:$0xf]
    %v2041 = vld [vmem:[#allocation10 + $0x6c] sm:$0xf]
    %v2042 = vld [vmem:[#allocation10 + $0x70] sm:$0xf]
    %v2043 = vld [vmem:[#allocation10 + $0x74] sm:$0xf]
    %v2044 = vld [vmem:[#allocation10 + $0x78] sm:$0xf]
    %v2045 = vld [vmem:[#allocation10 + $0x7c] sm:$0xf]
    %v2046 = vld [vmem:[%s6] sm:$0x1]
    %v2048 = vlaneseq
    %v2049 = vshrl.u32 %v2048, 7
    %v2050 = vsub.s32 0, %v2049
    %v2051 = vrot.slane %v2046, %v2050
    %v2085 = vunpack.c.l.b16 %v2014
    %v2086 = vunpack.c.l.b16 %v2015
    %v2087 = vunpack.c.l.b16 %v2016
    %v2088 = vunpack.c.l.b16 %v2017
    %v2089 = vunpack.c.l.b16 %v2018
    %v2090 = vunpack.c.l.b16 %v2019
    %v2091 = vunpack.c.l.b16 %v2020
    %v2092 = vunpack.c.l.b16 %v2021
    %v2093 = vunpack.c.l.b16 %v2022
    %v2094 = vunpack.c.l.b16 %v2023
    %v2095 = vunpack.c.l.b16 %v2024
    %v2096 = vunpack.c.l.b16 %v2025
    %v2097 = vunpack.c.l.b16 %v2026
    %v2098 = vunpack.c.l.b16 %v2027
    %v2099 = vunpack.c.l.b16 %v2028
    %v2100 = vunpack.c.l.b16 %v2029
    %v2101 = vunpack.c.l.b16 %v2030
    %v2102 = vunpack.c.l.b16 %v2031
    %v2103 = vunpack.c.l.b16 %v2032
    %v2104 = vunpack.c.l.b16 %v2033
    %v2105 = vunpack.c.l.b16 %v2034
    %v2106 = vunpack.c.l.b16 %v2035
    %v2107 = vunpack.c.l.b16 %v2036
    %v2108 = vunpack.c.l.b16 %v2037
    %v2109 = vunpack.c.l.b16 %v2038
    %v2110 = vunpack.c.l.b16 %v2039
    %v2111 = vunpack.c.l.b16 %v2040
    %v2112 = vunpack.c.l.b16 %v2041
    %v2113 = vunpack.c.l.b16 %v2042
    %v2114 = vunpack.c.l.b16 %v2043
    %v2115 = vunpack.c.l.b16 %v2044
    %v2116 = vunpack.c.l.b16 %v2045
    %v2117 = vpack.c.b16 %v2086, %v2085
    %v2118 = vpack.c.b16 %v2088, %v2087
    %v2119 = vpack.c.b16 %v2090, %v2089
    %v2120 = vpack.c.b16 %v2092, %v2091
    %v2121 = vpack.c.b16 %v2094, %v2093
    %v2122 = vpack.c.b16 %v2096, %v2095
    %v2123 = vpack.c.b16 %v2098, %v2097
    %v2124 = vpack.c.b16 %v2100, %v2099
    %v2125 = vpack.c.b16 %v2102, %v2101
    %v2126 = vpack.c.b16 %v2104, %v2103
    %v2127 = vpack.c.b16 %v2106, %v2105
    %v2128 = vpack.c.b16 %v2108, %v2107
    %v2129 = vpack.c.b16 %v2110, %v2109
    %v2130 = vpack.c.b16 %v2112, %v2111
    %v2131 = vpack.c.b16 %v2114, %v2113
    %v2132 = vpack.c.b16 %v2116, %v2115
    %2149 = vmatprep.subr.bf16.mxu0 0
    %2150 = vmatpush1.bf16.msra.mxu0 %v2124
    %2151 = vmatprep.subr.bf16.mxu0 0
    %2152 = vmatpush1.bf16.msra.mxu0 %v2123
    %2153 = vmatprep.subr.bf16.mxu0 0
    %2154 = vmatpush1.bf16.msra.mxu0 %v2122
    %2155 = vmatprep.subr.bf16.mxu0 0
    %2156 = vmatpush1.bf16.msra.mxu0 %v2121
    %2157 = vmatprep.subr.bf16.mxu0 0
    %2158 = vmatpush1.bf16.msra.mxu0 %v2120
    %2159 = vmatprep.subr.bf16.mxu0 0
    %2160 = vmatpush1.bf16.msra.mxu0 %v2119
    %2161 = vmatprep.subr.bf16.mxu0 0
    %2162 = vmatpush1.bf16.msra.mxu0 %v2118
    %2163 = vmatprep.subr.bf16.mxu0 0
    %2164 = vmatpush1.bf16.msra.mxu0 %v2117
    %2165 = vmatprep.subr.bf16.mxu0 0
    %2166 = vmatpush2.bf16.msra.mxu0 %v2132
    %2167 = vmatprep.subr.bf16.mxu0 0
    %2168 = vmatpush2.bf16.msra.mxu0 %v2131
    %2169 = vmatprep.subr.bf16.mxu0 0
    %2170 = vmatpush2.bf16.msra.mxu0 %v2130
    %2171 = vmatprep.subr.bf16.mxu0 0
    %2172 = vmatpush2.bf16.msra.mxu0 %v2129
    %2173 = vmatprep.subr.bf16.mxu0 0
    %2174 = vmatpush2.bf16.msra.mxu0 %v2128
    %2175 = vmatprep.subr.bf16.mxu0 0
    %2176 = vmatpush2.bf16.msra.mxu0 %v2127
    %2177 = vmatprep.subr.bf16.mxu0 0
    %2178 = vmatpush2.bf16.msra.mxu0 %v2126
    %2179 = vmatprep.subr.bf16.mxu0 0
    %2180 = vmatpush2.bf16.msra.mxu0 %v2125
    %2181 = vmatprep.mubr.bf16.mxu0 %v2013
    %2182 = vmatmul.mubr.bf16.gmra.mxu0 %v2012
    %v2183 = vpop.f32.mrf.mxu0
    %v2184 = vadd.f32 %v2051, %v2183
    %v2185 = vpop.f32.mrf.mxu0
    %v2186 = vpop.f32.mrf.mxu0
    %v2187 = vpop.f32.mrf.mxu0
    %2188 = vdwg.mxu0
    %2189 = vst [vmem:[#allocation11] sm:$0xff] %v2184
    // Predicated region
    $region50: #{tpu_custom_call.1} parent=1 // pred_check
      _
    $region51: #{tpu_custom_call.1} parent=1 // pred_check_branch
      %2191 = sbr.rel (0) target = $region53
    $region52: #{tpu_custom_call.1} parent=1 // pred_region
      %s2193 = ssub.s32 128, 128
      %2194 = vsyncadd [#allocation4], %s2193
      %s2196 = sshll.u32 [#allocation11], 4
      %s2197 = int_to_ptr.vmem [resolvable:$true] %s2196
      %2199 = dma.vmem_to_hbm [thread:$0]  %s2197, 128, %s7, [#allocation4]
    $region53: #{tpu_custom_call.1} parent=1 // pred_fallthru
      _
    // Predicated region
    $region54: #{tpu_custom_call.1} parent=1 // pred_check
      _
    $region55: #{tpu_custom_call.1} parent=1 // pred_check_branch
      %2201 = sbr.rel (0) target = $region57
    $region56: #{tpu_custom_call.1} parent=1 // pred_region
      %2202 = dma.done [#allocation4], 128
    $region57: #{tpu_custom_call.1} parent=1 // pred_fallthru
      _
    %2203 = vsyncpa [#allocation3], 1
    %2204 = vsyncpa [#allocation6], 1
    %2205 = vsyncpa [#allocation9], 1
    %2206 = vsyncpa [#allocation4], 1

</llo_original>
